<compile_context>
chip_gen: v6e
topology: v6e:2x2x1
jax: 0.10.0
libtpu: 0.0.40
codegen_flags: <defaults>
</compile_context>

<pallas_src>
import jax
import jax.numpy as jnp
from jax.experimental import pallas as pl
from jax.experimental.pallas import tpu as pltpu


def _round_up(x, m):
    return ((x + m - 1) // m) * m


def _vmem_capacity_bytes():
    """Per-core VMEM capacity; conservative fallback if the query fails."""
    try:
        info = pltpu.get_tpu_info()
        cap = getattr(info, "vmem_capacity_bytes", None)
        if cap:
            return int(cap)
    except Exception:
        pass
    return 64 << 20  # v7x-sized fallback (smallest current generation)


def _per_step_vmem_bytes(bb, sq, sk, in_f, hp, d, in_bytes=2, out_bytes=4):
    """Rough steady-state VMEM estimate for one grid step."""
    act = 2 * bb * (sq + 2 * sk) * in_f * in_bytes          # double-buffered q/k/v in
    act += 2 * bb * sq * d * out_bytes                      # double-buffered output
    w = (3 * in_f * hp + hp * d) * in_bytes + (3 * hp + d) * 4   # resident weights/biases
    tmp = bb * (sq + 2 * sk) * hp * 6                       # q/k/v projections (f32+bf16)
    tmp += bb * sq * sk * 8                                 # scores + exp (f32)
    tmp += bb * sq * hp * 6                                 # attended (f32+bf16)
    return act + w + int(1.5 * tmp)


def _pick_batch_block(batch, sq, sk, in_f, hp, d, vmem_budget, target_rows=256):
    """Batch elements per grid step: ~target_rows folded rows, VMEM-bounded,
    and grid >= 2 so both v7x TensorCores get work on the parallel axis."""
    bb = max(1, target_rows // max(sq, sk, 1))
    bb = min(bb, batch)
    if batch >= 2:
        bb = min(bb, (batch + 1) // 2)
    while bb > 1 and _per_step_vmem_bytes(bb, sq, sk, in_f, hp, d) > vmem_budget:
        bb = (bb + 1) // 2
    return max(bb, 1)


def _make_kernel(sk_true, sk_pad):
    def kernel(q_ref, k_ref, v_ref,
               wq_ref, bq_ref, wk_ref, bk_ref, wv_ref, bv_ref,
               wd_ref, bd_ref, o_ref):
        bb, sq, in_f = q_ref.shape
        _, skp, _ = k_ref.shape
        hp = wq_ref.shape[1]
        d = wd_ref.shape[1]
        cdt = wq_ref.dtype                      # MXU operand dtype (bf16)

        # ---- Q/K/V projections: one big matmul over all (batch, seq) rows ----
        q2 = q_ref[...].reshape(bb * sq, in_f)
        k2 = k_ref[...].reshape(bb * skp, in_f)
        v2 = v_ref[...].reshape(bb * skp, in_f)

        q = jnp.dot(q2, wq_ref[...], preferred_element_type=jnp.float32) + bq_ref[...]
        k = jnp.dot(k2, wk_ref[...], preferred_element_type=jnp.float32) + bk_ref[...]
        v = jnp.dot(v2, wv_ref[...], preferred_element_type=jnp.float32) + bv_ref[...]

        q3 = q.reshape(bb, sq, hp).astype(cdt)
        k3 = k.reshape(bb, skp, hp).astype(cdt)
        v3 = v.reshape(bb, skp, hp).astype(cdt)

        # ---- scores = q @ k^T (batched contraction, no explicit transpose) ----
        scores = jnp.einsum("bqh,bkh->bqk", q3, k3,
                            preferred_element_type=jnp.float32)   # (bb, sq, skp) f32
        if sk_pad != sk_true:
            col = jax.lax.broadcasted_iota(jnp.int32, scores.shape, 2)
            scores = jnp.where(col < sk_true, scores, -jnp.inf)
        scores = scores - jnp.max(scores, axis=-1, keepdims=True)
        p = jnp.exp(scores)
        p = p * pl.reciprocal(jnp.sum(p, axis=-1, keepdims=True), approx=True)

        # ---- attended = p @ v ; output projection at true depth D ----
        attended = jnp.einsum("bqk,bkh->bqh", p.astype(cdt), v3,
                              preferred_element_type=jnp.float32)  # (bb, sq, hp)
        out = jnp.dot(attended.reshape(bb * sq, hp).astype(cdt), wd_ref[...],
                      preferred_element_type=jnp.float32) + bd_ref[...]

        o_ref[...] = out.reshape(bb, sq, d).astype(o_ref.dtype)

    return kernel


def prepare_params(params, *, compute_dtype=jnp.bfloat16):
    """One-time weight padding / bf16 cast, hoisted out of the per-call hot path."""
    wq, bq, wk, bk, wv, bv, wd, bd = params
    in_f, h = wq.shape
    d = wd.shape[1]
    hp = _round_up(h, 128)

    def pad_w(w, rows, cols):
        return jnp.pad(w, ((0, rows - w.shape[0]), (0, cols - w.shape[1])))

    def pad_b(b, cols):
        return jnp.pad(b, ((0, 0), (0, cols - b.shape[1])))

    return {
        "wq": pad_w(wq, in_f, hp).astype(compute_dtype),
        "wk": pad_w(wk, in_f, hp).astype(compute_dtype),
        "wv": pad_w(wv, in_f, hp).astype(compute_dtype),
        "wd": pad_w(wd, hp, d).astype(compute_dtype),     # padded rows are zero -> exact
        "bq": pad_b(bq, hp),                               # biases stay f32
        "bk": pad_b(bk, hp),
        "bv": pad_b(bv, hp),
        "bd": bd,
        "in_features": in_f,
        "hidden": h,
        "hidden_padded": hp,
        "depth": d,
        "compute_dtype": compute_dtype,
    }


def attention_forward(query, keys, values, prepared):
    """query: (B, Sq, In), keys/values: (B, Sk, In) -> (B, Sq, depth)."""
    B, Sq, In = query.shape
    _, Sk, _ = keys.shape
    assert In == prepared["in_features"]
    cdt = prepared["compute_dtype"]
    Hp = prepared["hidden_padded"]
    D = prepared["depth"]

    # Sublane-align the sequence dims so the in-kernel reshapes are layout no-ops.
    Sqp = _round_up(Sq, 8)
    Skp = _round_up(Sk, 8)

    vmem_cap = _vmem_capacity_bytes()
    Bb = _pick_batch_block(B, Sqp, Skp, In, Hp, D, int(0.6 * vmem_cap))
    Bp = _round_up(B, Bb)
    grid = (Bp // Bb,)

    q_c = query.astype(cdt)   # halves HBM->VMEM DMA bytes
    k_c = keys.astype(cdt)
    v_c = values.astype(cdt)
    if (Bp, Sqp) != (B, Sq):
        q_c = jnp.pad(q_c, ((0, Bp - B), (0, Sqp - Sq), (0, 0)))
    if (Bp, Skp) != (B, Sk):
        k_c = jnp.pad(k_c, ((0, Bp - B), (0, Skp - Sk), (0, 0)))
        v_c = jnp.pad(v_c, ((0, Bp - B), (0, Skp - Sk), (0, 0)))

    kernel = _make_kernel(Sk, Skp)

    steps = Bp // Bb
    mm_flops = 2 * Bb * ((Sqp + 2 * Skp) * In * Hp      # projections
                         + 2 * Sqp * Skp * Hp           # scores + attended
                         + Sqp * Hp * D)                 # output projection
    cost = pl.CostEstimate(
        flops=int(mm_flops * steps),
        transcendentals=int(Bp * Sqp * (Skp + 1)),       # exp + reciprocal
        bytes_accessed=int((Bp * (Sqp + 2 * Skp) * In + 3 * In * Hp + Hp * D) * 2
                           + (3 * Hp + D) * 4
                           + Bp * Sqp * D * query.dtype.itemsize))

    vmem_limit = int(min(0.9 * vmem_cap,
                         max(32 << 20,
                             2 * _per_step_vmem_bytes(Bb, Sqp, Skp, In, Hp, D))))

    def build(single_buffer_weights):
        if single_buffer_weights:
            # Constant index map -> DMA'd once; single-buffer to halve resident VMEM.
            const = lambda shape: pl.BlockSpec(shape, lambda b: (0,) * len(shape),
                                               pipeline_mode=pl.Buffered(1))
        else:
            const = lambda shape: pl.BlockSpec(shape, lambda b: (0,) * len(shape))

        grid_spec = pltpu.PrefetchScalarGridSpec(
            num_scalar_prefetch=0,
            grid=grid,
            in_specs=[
                pl.BlockSpec((Bb, Sqp, In), lambda b: (b, 0, 0)),   # query
                pl.BlockSpec((Bb, Skp, In), lambda b: (b, 0, 0)),   # keys
                pl.BlockSpec((Bb, Skp, In), lambda b: (b, 0, 0)),   # values
                const((In, Hp)), const((1, Hp)),                    # Wq, bq
                const((In, Hp)), const((1, Hp)),                    # Wk, bk
                const((In, Hp)), const((1, Hp)),                    # Wv, bv
                const((Hp, D)), const((1, D)),                      # Wd, bd
            ],
            out_specs=pl.BlockSpec((Bb, Sqp, D), lambda b: (b, 0, 0)),
        )
        return pl.pallas_call(
            kernel,
            out_shape=jax.ShapeDtypeStruct((Bp, Sqp, D), query.dtype),
            grid_spec=grid_spec,
            compiler_params=pltpu.CompilerParams(
                dimension_semantics=("parallel",),
                vmem_limit_bytes=vmem_limit),
            cost_estimate=cost,
        )

    args = (q_c, k_c, v_c,
            prepared["wq"], prepared["bq"], prepared["wk"], prepared["bk"],
            prepared["wv"], prepared["bv"], prepared["wd"], prepared["bd"])
    try:
        out = build(True)(*args)
    except Exception:
        # Fallback if this jax build rejects pipeline_mode=pl.Buffered(1).
        out = build(False)(*args)

    if (Bp, Sqp) != (B, Sq):
        out = out[:B, :Sq, :]
    return out


def init_params(key, input_size, hidden_size, depth):
    ks = jax.random.split(key, 8)
    # deterministic synthetic init (uniform, nn.Linear-style scaling)
    def lin(kw, kb, fan_in, fan_out):
        bound = 1.0 / jnp.sqrt(fan_in)
        w = jax.random.uniform(kw, (fan_in, fan_out), jnp.float32, -bound, bound)
        b = jax.random.uniform(kb, (1, fan_out), jnp.float32, -bound, bound)
        return w, b
    wq, bq = lin(ks[0], ks[1], input_size, hidden_size)
    wk, bk = lin(ks[2], ks[3], input_size, hidden_size)
    wv, bv = lin(ks[4], ks[5], input_size, hidden_size)
    wd, bd = lin(ks[6], ks[7], hidden_size, depth)
    return (wq, bq, wk, bk, wv, bv, wd, bd)


def reference_forward(query, keys, values, params):
    wq, bq, wk, bk, wv, bv, wd, bd = params
    q = query @ wq + bq
    k = keys @ wk + bk
    v = values @ wv + bv
    scores = jax.nn.softmax(jnp.einsum("bqh,bkh->bqk", q, k), axis=-1)
    attended = jnp.einsum("bqk,bkh->bqh", scores, v)
    return attended @ wd + bd


if __name__ == "__main__":
    B, Sq, Sk = 2, 8, 8
    input_size, hidden_size, depth = 16, 32, 16

    key = jax.random.PRNGKey(0)
    kq, kk, kv, kp = jax.random.split(key, 4)
    query = jax.random.normal(kq, (B, Sq, input_size), jnp.float32)
    keys = jax.random.normal(kk, (B, Sk, input_size), jnp.float32)
    values = jax.random.normal(kv, (B, Sk, input_size), jnp.float32)
    params = init_params(kp, input_size, hidden_size, depth)

    prepared = prepare_params(params)   # one-time weight padding/casts (hoisted)
    out = attention_forward(query, keys, values, prepared)
    out = jax.block_until_ready(out)

    ref = reference_forward(query, keys, values, params)
    assert out.shape == (B, Sq, depth)
    err = float(jnp.max(jnp.abs(out - ref)))
    # bf16 MXU operands (f32 accumulation) + approx reciprocal -> ~1e-2-level
    # agreement with the all-f32 reference.
    assert jnp.allclose(out, ref, atol=3e-2, rtol=3e-2), err

    print("KERNEL_OK")
</pallas_src>

<mosaic_0001>
module attributes {stable_mosaic.version = 11 : i64} {
  func.func @kernel(%arg0: i32, %arg1: memref<1x8x16xbf16, #tpu.memory_space<vmem>>, %arg2: memref<1x8x16xbf16, #tpu.memory_space<vmem>>, %arg3: memref<1x8x16xbf16, #tpu.memory_space<vmem>>, %arg4: memref<16x128xbf16, #tpu.memory_space<vmem>>, %arg5: memref<1x128xf32, #tpu.memory_space<vmem>>, %arg6: memref<16x128xbf16, #tpu.memory_space<vmem>>, %arg7: memref<1x128xf32, #tpu.memory_space<vmem>>, %arg8: memref<16x128xbf16, #tpu.memory_space<vmem>>, %arg9: memref<1x128xf32, #tpu.memory_space<vmem>>, %arg10: memref<128x16xbf16, #tpu.memory_space<vmem>>, %arg11: memref<1x16xf32, #tpu.memory_space<vmem>>, %arg12: memref<1x8x16xf32, #tpu.memory_space<vmem>>) attributes {dimension_semantics = [#tpu.dimension_semantics<parallel>], iteration_bounds = array<i64: 2>, scalar_prefetch = 0 : i64, scratch_operands = 0 : i64, tpu.core_type = #tpu.core_type<tc>, window_params = [{transform_indices = @transform_0, window_bounds = array<i64: 1, 8, 16>}, {transform_indices = @transform_1, window_bounds = array<i64: 1, 8, 16>}, {transform_indices = @transform_2, window_bounds = array<i64: 1, 8, 16>}, {pipeline_mode = #tpu.pipeline_mode<synchronous>, transform_indices = @transform_3, window_bounds = array<i64: 16, 128>}, {pipeline_mode = #tpu.pipeline_mode<synchronous>, transform_indices = @transform_4, window_bounds = array<i64: 1, 128>}, {pipeline_mode = #tpu.pipeline_mode<synchronous>, transform_indices = @transform_5, window_bounds = array<i64: 16, 128>}, {pipeline_mode = #tpu.pipeline_mode<synchronous>, transform_indices = @transform_6, window_bounds = array<i64: 1, 128>}, {pipeline_mode = #tpu.pipeline_mode<synchronous>, transform_indices = @transform_7, window_bounds = array<i64: 16, 128>}, {pipeline_mode = #tpu.pipeline_mode<synchronous>, transform_indices = @transform_8, window_bounds = array<i64: 1, 128>}, {pipeline_mode = #tpu.pipeline_mode<synchronous>, transform_indices = @transform_9, window_bounds = array<i64: 128, 16>}, {pipeline_mode = #tpu.pipeline_mode<synchronous>, transform_indices = @transform_10, window_bounds = array<i64: 1, 16>}, {transform_indices = @transform_11, window_bounds = array<i64: 1, 8, 16>}]} {
    %c0 = arith.constant 0 : index
    %c0_0 = arith.constant 0 : index
    %c0_1 = arith.constant 0 : index
    %0 = vector.load %arg1[%c0, %c0_0, %c0_1] : memref<1x8x16xbf16, #tpu.memory_space<vmem>>, vector<1x8x16xbf16>
    %1 = vector.shape_cast %0 : vector<1x8x16xbf16> to vector<8x16xbf16>
    %c0_2 = arith.constant 0 : index
    %c0_3 = arith.constant 0 : index
    %c0_4 = arith.constant 0 : index
    %2 = vector.load %arg2[%c0_2, %c0_3, %c0_4] : memref<1x8x16xbf16, #tpu.memory_space<vmem>>, vector<1x8x16xbf16>
    %3 = vector.shape_cast %2 : vector<1x8x16xbf16> to vector<8x16xbf16>
    %c0_5 = arith.constant 0 : index
    %c0_6 = arith.constant 0 : index
    %c0_7 = arith.constant 0 : index
    %4 = vector.load %arg3[%c0_5, %c0_6, %c0_7] : memref<1x8x16xbf16, #tpu.memory_space<vmem>>, vector<1x8x16xbf16>
    %5 = vector.shape_cast %4 : vector<1x8x16xbf16> to vector<8x16xbf16>
    %c0_8 = arith.constant 0 : index
    %c0_9 = arith.constant 0 : index
    %6 = vector.load %arg4[%c0_8, %c0_9] : memref<16x128xbf16, #tpu.memory_space<vmem>>, vector<16x128xbf16>
    %cst = arith.constant dense<0.000000e+00> : vector<8x128xf32>
    %7 = tpu.matmul %1, %6, %cst {dimension_numbers = #tpu.dot_dimension_numbers<[1], [0], [0], [1], [0, 0, 1, 1], [], []>} : vector<8x16xbf16>, vector<16x128xbf16>, vector<8x128xf32> -> vector<8x128xf32>
    %c0_10 = arith.constant 0 : index
    %c0_11 = arith.constant 0 : index
    %8 = vector.load %arg5[%c0_10, %c0_11] : memref<1x128xf32, #tpu.memory_space<vmem>>, vector<1x128xf32>
    %9 = vector.broadcast %8 : vector<1x128xf32> to vector<8x128xf32>
    %10 = arith.addf %7, %9 : vector<8x128xf32>
    %c0_12 = arith.constant 0 : index
    %c0_13 = arith.constant 0 : index
    %11 = vector.load %arg6[%c0_12, %c0_13] : memref<16x128xbf16, #tpu.memory_space<vmem>>, vector<16x128xbf16>
    %cst_14 = arith.constant dense<0.000000e+00> : vector<8x128xf32>
    %12 = tpu.matmul %3, %11, %cst_14 {dimension_numbers = #tpu.dot_dimension_numbers<[1], [0], [0], [1], [0, 0, 1, 1], [], []>} : vector<8x16xbf16>, vector<16x128xbf16>, vector<8x128xf32> -> vector<8x128xf32>
    %c0_15 = arith.constant 0 : index
    %c0_16 = arith.constant 0 : index
    %13 = vector.load %arg7[%c0_15, %c0_16] : memref<1x128xf32, #tpu.memory_space<vmem>>, vector<1x128xf32>
    %14 = vector.broadcast %13 : vector<1x128xf32> to vector<8x128xf32>
    %15 = arith.addf %12, %14 : vector<8x128xf32>
    %c0_17 = arith.constant 0 : index
    %c0_18 = arith.constant 0 : index
    %16 = vector.load %arg8[%c0_17, %c0_18] : memref<16x128xbf16, #tpu.memory_space<vmem>>, vector<16x128xbf16>
    %cst_19 = arith.constant dense<0.000000e+00> : vector<8x128xf32>
    %17 = tpu.matmul %5, %16, %cst_19 {dimension_numbers = #tpu.dot_dimension_numbers<[1], [0], [0], [1], [0, 0, 1, 1], [], []>} : vector<8x16xbf16>, vector<16x128xbf16>, vector<8x128xf32> -> vector<8x128xf32>
    %c0_20 = arith.constant 0 : index
    %c0_21 = arith.constant 0 : index
    %18 = vector.load %arg9[%c0_20, %c0_21] : memref<1x128xf32, #tpu.memory_space<vmem>>, vector<1x128xf32>
    %19 = vector.broadcast %18 : vector<1x128xf32> to vector<8x128xf32>
    %20 = arith.addf %17, %19 : vector<8x128xf32>
    %21 = vector.shape_cast %10 : vector<8x128xf32> to vector<1x8x128xf32>
    %22 = arith.truncf %21 : vector<1x8x128xf32> to vector<1x8x128xbf16>
    %23 = vector.shape_cast %15 : vector<8x128xf32> to vector<1x8x128xf32>
    %24 = arith.truncf %23 : vector<1x8x128xf32> to vector<1x8x128xbf16>
    %25 = vector.shape_cast %20 : vector<8x128xf32> to vector<1x8x128xf32>
    %26 = arith.truncf %25 : vector<1x8x128xf32> to vector<1x8x128xbf16>
    "tpu.trace_start"() <{level = 10 : i32, message = "bqh,bkh->bqk"}> : () -> ()
    %cst_22 = arith.constant dense<0.000000e+00> : vector<1x8x8xf32>
    %27 = tpu.matmul %22, %24, %cst_22 {dimension_numbers = #tpu.dot_dimension_numbers<[2], [2], [1], [1], [0, 0, 0, 1, 1, 1], [0], [0]>} : vector<1x8x128xbf16>, vector<1x8x128xbf16>, vector<1x8x8xf32> -> vector<1x8x8xf32>
    "tpu.trace_stop"() : () -> ()
    %cst_23 = arith.constant dense<0xFF800000> : vector<1x8xf32>
    %28 = vector.multi_reduction <maximumf>, %27, %cst_23 [2] : vector<1x8x8xf32> to vector<1x8xf32>
    %29 = vector.shape_cast %28 : vector<1x8xf32> to vector<1x8x1xf32>
    %30 = vector.broadcast %29 : vector<1x8x1xf32> to vector<1x8x8xf32>
    %31 = arith.subf %27, %30 : vector<1x8x8xf32>
    %32 = math.exp %31 : vector<1x8x8xf32>
    %cst_24 = arith.constant dense<0.000000e+00> : vector<1x8xf32>
    %33 = vector.multi_reduction <add>, %32, %cst_24 [2] : vector<1x8x8xf32> to vector<1x8xf32>
    %34 = vector.shape_cast %33 : vector<1x8xf32> to vector<1x8x1xf32>
    %35 = tpu.reciprocal %34 {approx = true} : vector<1x8x1xf32> -> vector<1x8x1xf32>
    %36 = vector.broadcast %35 : vector<1x8x1xf32> to vector<1x8x8xf32>
    %37 = arith.mulf %32, %36 : vector<1x8x8xf32>
    %38 = arith.truncf %37 : vector<1x8x8xf32> to vector<1x8x8xbf16>
    "tpu.trace_start"() <{level = 10 : i32, message = "bqk,bkh->bqh"}> : () -> ()
    %cst_25 = arith.constant dense<0.000000e+00> : vector<1x8x128xf32>
    %39 = tpu.matmul %38, %26, %cst_25 {dimension_numbers = #tpu.dot_dimension_numbers<[2], [1], [1], [2], [0, 0, 0, 1, 1, 2], [0], [0]>} : vector<1x8x8xbf16>, vector<1x8x128xbf16>, vector<1x8x128xf32> -> vector<1x8x128xf32>
    "tpu.trace_stop"() : () -> ()
    %40 = vector.shape_cast %39 : vector<1x8x128xf32> to vector<8x128xf32>
    %41 = arith.truncf %40 : vector<8x128xf32> to vector<8x128xbf16>
    %c0_26 = arith.constant 0 : index
    %c0_27 = arith.constant 0 : index
    %42 = vector.load %arg10[%c0_26, %c0_27] : memref<128x16xbf16, #tpu.memory_space<vmem>>, vector<128x16xbf16>
    %cst_28 = arith.constant dense<0.000000e+00> : vector<8x16xf32>
    %43 = tpu.matmul %41, %42, %cst_28 {dimension_numbers = #tpu.dot_dimension_numbers<[1], [0], [0], [1], [0, 0, 1, 1], [], []>} : vector<8x128xbf16>, vector<128x16xbf16>, vector<8x16xf32> -> vector<8x16xf32>
    %c0_29 = arith.constant 0 : index
    %c0_30 = arith.constant 0 : index
    %44 = vector.load %arg11[%c0_29, %c0_30] : memref<1x16xf32, #tpu.memory_space<vmem>>, vector<1x16xf32>
    %45 = vector.broadcast %44 : vector<1x16xf32> to vector<8x16xf32>
    %46 = arith.addf %43, %45 : vector<8x16xf32>
    %47 = vector.shape_cast %46 : vector<8x16xf32> to vector<1x8x16xf32>
    %c0_31 = arith.constant 0 : index
    %c0_32 = arith.constant 0 : index
    %c0_33 = arith.constant 0 : index
    %48 = vector.load %arg12[%c0_31, %c0_32, %c0_33] : memref<1x8x16xf32, #tpu.memory_space<vmem>>, vector<1x8x16xf32>
    tpu.vector_store %arg12[%c0_31, %c0_32, %c0_33], %47 {strides = array<i32>} : memref<1x8x16xf32, #tpu.memory_space<vmem>>, vector<1x8x16xf32>,
    return
  }
  func.func @transform_0(%arg0: i32) -> (i32, i32, i32) {
    %c0_i32 = arith.constant 0 : i32
    %c0_i32_0 = arith.constant 0 : i32
    %c0_i32_1 = arith.constant 0 : i32
    return %arg0, %c0_i32, %c0_i32_0 : i32, i32, i32
  }
  func.func @transform_1(%arg0: i32) -> (i32, i32, i32) {
    %c0_i32 = arith.constant 0 : i32
    %c0_i32_0 = arith.constant 0 : i32
    %c0_i32_1 = arith.constant 0 : i32
    return %arg0, %c0_i32, %c0_i32_0 : i32, i32, i32
  }
  func.func @transform_2(%arg0: i32) -> (i32, i32, i32) {
    %c0_i32 = arith.constant 0 : i32
    %c0_i32_0 = arith.constant 0 : i32
    %c0_i32_1 = arith.constant 0 : i32
    return %arg0, %c0_i32, %c0_i32_0 : i32, i32, i32
  }
  func.func @transform_3(%arg0: i32) -> (i32, i32) {
    %c0_i32 = arith.constant 0 : i32
    %c0_i32_0 = arith.constant 0 : i32
    %c0_i32_1 = arith.constant 0 : i32
    return %c0_i32, %c0_i32_0 : i32, i32
  }
  func.func @transform_4(%arg0: i32) -> (i32, i32) {
    %c0_i32 = arith.constant 0 : i32
    %c0_i32_0 = arith.constant 0 : i32
    %c0_i32_1 = arith.constant 0 : i32
    return %c0_i32, %c0_i32_0 : i32, i32
  }
  func.func @transform_5(%arg0: i32) -> (i32, i32) {
    %c0_i32 = arith.constant 0 : i32
    %c0_i32_0 = arith.constant 0 : i32
    %c0_i32_1 = arith.constant 0 : i32
    return %c0_i32, %c0_i32_0 : i32, i32
  }
  func.func @transform_6(%arg0: i32) -> (i32, i32) {
    %c0_i32 = arith.constant 0 : i32
    %c0_i32_0 = arith.constant 0 : i32
    %c0_i32_1 = arith.constant 0 : i32
    return %c0_i32, %c0_i32_0 : i32, i32
  }
  func.func @transform_7(%arg0: i32) -> (i32, i32) {
    %c0_i32 = arith.constant 0 : i32
    %c0_i32_0 = arith.constant 0 : i32
    %c0_i32_1 = arith.constant 0 : i32
    return %c0_i32, %c0_i32_0 : i32, i32
  }
  func.func @transform_8(%arg0: i32) -> (i32, i32) {
    %c0_i32 = arith.constant 0 : i32
    %c0_i32_0 = arith.constant 0 : i32
    %c0_i32_1 = arith.constant 0 : i32
    return %c0_i32, %c0_i32_0 : i32, i32
  }
  func.func @transform_9(%arg0: i32) -> (i32, i32) {
    %c0_i32 = arith.constant 0 : i32
    %c0_i32_0 = arith.constant 0 : i32
    %c0_i32_1 = arith.constant 0 : i32
    return %c0_i32, %c0_i32_0 : i32, i32
  }
  func.func @transform_10(%arg0: i32) -> (i32, i32) {
    %c0_i32 = arith.constant 0 : i32
    %c0_i32_0 = arith.constant 0 : i32
    %c0_i32_1 = arith.constant 0 : i32
    return %c0_i32, %c0_i32_0 : i32, i32
  }
  func.func @transform_11(%arg0: i32) -> (i32, i32, i32) {
    %c0_i32 = arith.constant 0 : i32
    %c0_i32_0 = arith.constant 0 : i32
    %c0_i32_1 = arith.constant 0 : i32
    return %arg0, %c0_i32, %c0_i32_0 : i32, i32, i32
  }
}

module attributes {stable_mosaic.version = 11 : i64} {
  func.func @kernel(%arg0: i32, %arg1: memref<1x8x16xbf16, #tpu.memory_space<vmem>>, %arg2: memref<1x8x16xbf16, #tpu.memory_space<vmem>>, %arg3: memref<1x8x16xbf16, #tpu.memory_space<vmem>>, %arg4: memref<16x128xbf16, #tpu.memory_space<vmem>>, %arg5: memref<1x128xf32, #tpu.memory_space<vmem>>, %arg6: memref<16x128xbf16, #tpu.memory_space<vmem>>, %arg7: memref<1x128xf32, #tpu.memory_space<vmem>>, %arg8: memref<16x128xbf16, #tpu.memory_space<vmem>>, %arg9: memref<1x128xf32, #tpu.memory_space<vmem>>, %arg10: memref<128x16xbf16, #tpu.memory_space<vmem>>, %arg11: memref<1x16xf32, #tpu.memory_space<vmem>>, %arg12: memref<1x8x16xf32, #tpu.memory_space<vmem>>) attributes {dimension_semantics = [#tpu.dimension_semantics<parallel>], iteration_bounds = array<i64: 2>, scalar_prefetch = 0 : i64, scratch_operands = 0 : i64, tpu.core_type = #tpu.core_type<tc>, window_params = [{transform_indices = @transform_0, window_bounds = array<i64: 1, 8, 16>}, {transform_indices = @transform_1, window_bounds = array<i64: 1, 8, 16>}, {transform_indices = @transform_2, window_bounds = array<i64: 1, 8, 16>}, {pipeline_mode = #tpu.pipeline_mode<synchronous>, transform_indices = @transform_3, window_bounds = array<i64: 16, 128>}, {pipeline_mode = #tpu.pipeline_mode<synchronous>, transform_indices = @transform_4, window_bounds = array<i64: 1, 128>}, {pipeline_mode = #tpu.pipeline_mode<synchronous>, transform_indices = @transform_5, window_bounds = array<i64: 16, 128>}, {pipeline_mode = #tpu.pipeline_mode<synchronous>, transform_indices = @transform_6, window_bounds = array<i64: 1, 128>}, {pipeline_mode = #tpu.pipeline_mode<synchronous>, transform_indices = @transform_7, window_bounds = array<i64: 16, 128>}, {pipeline_mode = #tpu.pipeline_mode<synchronous>, transform_indices = @transform_8, window_bounds = array<i64: 1, 128>}, {pipeline_mode = #tpu.pipeline_mode<synchronous>, transform_indices = @transform_9, window_bounds = array<i64: 128, 16>}, {pipeline_mode = #tpu.pipeline_mode<synchronous>, transform_indices = @transform_10, window_bounds = array<i64: 1, 16>}, {transform_indices = @transform_11, window_bounds = array<i64: 1, 8, 16>}]} {
    %c0 = arith.constant 0 : index
    %c0_0 = arith.constant 0 : index
    %c0_1 = arith.constant 0 : index
    %0 = vector.load %arg1[%c0, %c0_0, %c0_1] : memref<1x8x16xbf16, #tpu.memory_space<vmem>>, vector<1x8x16xbf16>
    %1 = vector.shape_cast %0 : vector<1x8x16xbf16> to vector<8x16xbf16>
    %c0_2 = arith.constant 0 : index
    %c0_3 = arith.constant 0 : index
    %c0_4 = arith.constant 0 : index
    %2 = vector.load %arg2[%c0_2, %c0_3, %c0_4] : memref<1x8x16xbf16, #tpu.memory_space<vmem>>, vector<1x8x16xbf16>
    %3 = vector.shape_cast %2 : vector<1x8x16xbf16> to vector<8x16xbf16>
    %c0_5 = arith.constant 0 : index
    %c0_6 = arith.constant 0 : index
    %c0_7 = arith.constant 0 : index
    %4 = vector.load %arg3[%c0_5, %c0_6, %c0_7] : memref<1x8x16xbf16, #tpu.memory_space<vmem>>, vector<1x8x16xbf16>
    %5 = vector.shape_cast %4 : vector<1x8x16xbf16> to vector<8x16xbf16>
    %c0_8 = arith.constant 0 : index
    %c0_9 = arith.constant 0 : index
    %6 = vector.load %arg4[%c0_8, %c0_9] : memref<16x128xbf16, #tpu.memory_space<vmem>>, vector<16x128xbf16>
    %cst = arith.constant dense<0.000000e+00> : vector<8x128xf32>
    %7 = tpu.matmul %1, %6, %cst {dimension_numbers = #tpu.dot_dimension_numbers<[1], [0], [0], [1], [0, 0, 1, 1], [], []>} : vector<8x16xbf16>, vector<16x128xbf16>, vector<8x128xf32> -> vector<8x128xf32>
    %c0_10 = arith.constant 0 : index
    %c0_11 = arith.constant 0 : index
    %8 = vector.load %arg5[%c0_10, %c0_11] : memref<1x128xf32, #tpu.memory_space<vmem>>, vector<1x128xf32>
    %9 = vector.broadcast %8 : vector<1x128xf32> to vector<8x128xf32>
    %10 = arith.addf %7, %9 : vector<8x128xf32>
    %c0_12 = arith.constant 0 : index
    %c0_13 = arith.constant 0 : index
    %11 = vector.load %arg6[%c0_12, %c0_13] : memref<16x128xbf16, #tpu.memory_space<vmem>>, vector<16x128xbf16>
    %cst_14 = arith.constant dense<0.000000e+00> : vector<8x128xf32>
    %12 = tpu.matmul %3, %11, %cst_14 {dimension_numbers = #tpu.dot_dimension_numbers<[1], [0], [0], [1], [0, 0, 1, 1], [], []>} : vector<8x16xbf16>, vector<16x128xbf16>, vector<8x128xf32> -> vector<8x128xf32>
    %c0_15 = arith.constant 0 : index
    %c0_16 = arith.constant 0 : index
    %13 = vector.load %arg7[%c0_15, %c0_16] : memref<1x128xf32, #tpu.memory_space<vmem>>, vector<1x128xf32>
    %14 = vector.broadcast %13 : vector<1x128xf32> to vector<8x128xf32>
    %15 = arith.addf %12, %14 : vector<8x128xf32>
    %c0_17 = arith.constant 0 : index
    %c0_18 = arith.constant 0 : index
    %16 = vector.load %arg8[%c0_17, %c0_18] : memref<16x128xbf16, #tpu.memory_space<vmem>>, vector<16x128xbf16>
    %cst_19 = arith.constant dense<0.000000e+00> : vector<8x128xf32>
    %17 = tpu.matmul %5, %16, %cst_19 {dimension_numbers = #tpu.dot_dimension_numbers<[1], [0], [0], [1], [0, 0, 1, 1], [], []>} : vector<8x16xbf16>, vector<16x128xbf16>, vector<8x128xf32> -> vector<8x128xf32>
    %c0_20 = arith.constant 0 : index
    %c0_21 = arith.constant 0 : index
    %18 = vector.load %arg9[%c0_20, %c0_21] : memref<1x128xf32, #tpu.memory_space<vmem>>, vector<1x128xf32>
    %19 = vector.broadcast %18 : vector<1x128xf32> to vector<8x128xf32>
    %20 = arith.addf %17, %19 : vector<8x128xf32>
    %21 = vector.shape_cast %10 : vector<8x128xf32> to vector<1x8x128xf32>
    %22 = arith.truncf %21 : vector<1x8x128xf32> to vector<1x8x128xbf16>
    %23 = vector.shape_cast %15 : vector<8x128xf32> to vector<1x8x128xf32>
    %24 = arith.truncf %23 : vector<1x8x128xf32> to vector<1x8x128xbf16>
    %25 = vector.shape_cast %20 : vector<8x128xf32> to vector<1x8x128xf32>
    %26 = arith.truncf %25 : vector<1x8x128xf32> to vector<1x8x128xbf16>
    "tpu.trace_start"() <{level = 10 : i32, message = "bqh,bkh->bqk"}> : () -> ()
    %cst_22 = arith.constant dense<0.000000e+00> : vector<1x8x8xf32>
    %27 = tpu.matmul %22, %24, %cst_22 {dimension_numbers = #tpu.dot_dimension_numbers<[2], [2], [1], [1], [0, 0, 0, 1, 1, 1], [0], [0]>} : vector<1x8x128xbf16>, vector<1x8x128xbf16>, vector<1x8x8xf32> -> vector<1x8x8xf32>
    "tpu.trace_stop"() : () -> ()
    %cst_23 = arith.constant dense<0xFF800000> : vector<1x8xf32>
    %28 = vector.multi_reduction <maximumf>, %27, %cst_23 [2] : vector<1x8x8xf32> to vector<1x8xf32>
    %29 = vector.shape_cast %28 : vector<1x8xf32> to vector<1x8x1xf32>
    %30 = vector.broadcast %29 : vector<1x8x1xf32> to vector<1x8x8xf32>
    %31 = arith.subf %27, %30 : vector<1x8x8xf32>
    %32 = math.exp %31 : vector<1x8x8xf32>
    %cst_24 = arith.constant dense<0.000000e+00> : vector<1x8xf32>
    %33 = vector.multi_reduction <add>, %32, %cst_24 [2] : vector<1x8x8xf32> to vector<1x8xf32>
    %34 = vector.shape_cast %33 : vector<1x8xf32> to vector<1x8x1xf32>
    %35 = tpu.reciprocal %34 {approx = true} : vector<1x8x1xf32> -> vector<1x8x1xf32>
    %36 = vector.broadcast %35 : vector<1x8x1xf32> to vector<1x8x8xf32>
    %37 = arith.mulf %32, %36 : vector<1x8x8xf32>
    %38 = arith.truncf %37 : vector<1x8x8xf32> to vector<1x8x8xbf16>
    "tpu.trace_start"() <{level = 10 : i32, message = "bqk,bkh->bqh"}> : () -> ()
    %cst_25 = arith.constant dense<0.000000e+00> : vector<1x8x128xf32>
    %39 = tpu.matmul %38, %26, %cst_25 {dimension_numbers = #tpu.dot_dimension_numbers<[2], [1], [1], [2], [0, 0, 0, 1, 1, 2], [0], [0]>} : vector<1x8x8xbf16>, vector<1x8x128xbf16>, vector<1x8x128xf32> -> vector<1x8x128xf32>
    "tpu.trace_stop"() : () -> ()
    %40 = vector.shape_cast %39 : vector<1x8x128xf32> to vector<8x128xf32>
    %41 = arith.truncf %40 : vector<8x128xf32> to vector<8x128xbf16>
    %c0_26 = arith.constant 0 : index
    %c0_27 = arith.constant 0 : index
    %42 = vector.load %arg10[%c0_26, %c0_27] : memref<128x16xbf16, #tpu.memory_space<vmem>>, vector<128x16xbf16>
    %cst_28 = arith.constant dense<0.000000e+00> : vector<8x16xf32>
    %43 = tpu.matmul %41, %42, %cst_28 {dimension_numbers = #tpu.dot_dimension_numbers<[1], [0], [0], [1], [0, 0, 1, 1], [], []>} : vector<8x128xbf16>, vector<128x16xbf16>, vector<8x16xf32> -> vector<8x16xf32>
    %c0_29 = arith.constant 0 : index
    %c0_30 = arith.constant 0 : index
    %44 = vector.load %arg11[%c0_29, %c0_30] : memref<1x16xf32, #tpu.memory_space<vmem>>, vector<1x16xf32>
    %45 = vector.broadcast %44 : vector<1x16xf32> to vector<8x16xf32>
    %46 = arith.addf %43, %45 : vector<8x16xf32>
    %47 = vector.shape_cast %46 : vector<8x16xf32> to vector<1x8x16xf32>
    %c0_31 = arith.constant 0 : index
    %c0_32 = arith.constant 0 : index
    %c0_33 = arith.constant 0 : index
    %48 = vector.load %arg12[%c0_31, %c0_32, %c0_33] : memref<1x8x16xf32, #tpu.memory_space<vmem>>, vector<1x8x16xf32>
    tpu.vector_store %arg12[%c0_31, %c0_32, %c0_33], %47 {strides = array<i32>} : memref<1x8x16xf32, #tpu.memory_space<vmem>>, vector<1x8x16xf32>,
    return
  }
  func.func @transform_0(%arg0: i32) -> (i32, i32, i32) {
    %c0_i32 = arith.constant 0 : i32
    %c0_i32_0 = arith.constant 0 : i32
    %c0_i32_1 = arith.constant 0 : i32
    return %arg0, %c0_i32, %c0_i32_0 : i32, i32, i32
  }
  func.func @transform_1(%arg0: i32) -> (i32, i32, i32) {
    %c0_i32 = arith.constant 0 : i32
    %c0_i32_0 = arith.constant 0 : i32
    %c0_i32_1 = arith.constant 0 : i32
    return %arg0, %c0_i32, %c0_i32_0 : i32, i32, i32
  }
  func.func @transform_2(%arg0: i32) -> (i32, i32, i32) {
    %c0_i32 = arith.constant 0 : i32
    %c0_i32_0 = arith.constant 0 : i32
    %c0_i32_1 = arith.constant 0 : i32
    return %arg0, %c0_i32, %c0_i32_0 : i32, i32, i32
  }
  func.func @transform_3(%arg0: i32) -> (i32, i32) {
    %c0_i32 = arith.constant 0 : i32
    %c0_i32_0 = arith.constant 0 : i32
    %c0_i32_1 = arith.constant 0 : i32
    return %c0_i32, %c0_i32_0 : i32, i32
  }
  func.func @transform_4(%arg0: i32) -> (i32, i32) {
    %c0_i32 = arith.constant 0 : i32
    %c0_i32_0 = arith.constant 0 : i32
    %c0_i32_1 = arith.constant 0 : i32
    return %c0_i32, %c0_i32_0 : i32, i32
  }
  func.func @transform_5(%arg0: i32) -> (i32, i32) {
    %c0_i32 = arith.constant 0 : i32
    %c0_i32_0 = arith.constant 0 : i32
    %c0_i32_1 = arith.constant 0 : i32
    return %c0_i32, %c0_i32_0 : i32, i32
  }
  func.func @transform_6(%arg0: i32) -> (i32, i32) {
    %c0_i32 = arith.constant 0 : i32
    %c0_i32_0 = arith.constant 0 : i32
    %c0_i32_1 = arith.constant 0 : i32
    return %c0_i32, %c0_i32_0 : i32, i32
  }
  func.func @transform_7(%arg0: i32) -> (i32, i32) {
    %c0_i32 = arith.constant 0 : i32
    %c0_i32_0 = arith.constant 0 : i32
    %c0_i32_1 = arith.constant 0 : i32
    return %c0_i32, %c0_i32_0 : i32, i32
  }
  func.func @transform_8(%arg0: i32) -> (i32, i32) {
    %c0_i32 = arith.constant 0 : i32
    %c0_i32_0 = arith.constant 0 : i32
    %c0_i32_1 = arith.constant 0 : i32
    return %c0_i32, %c0_i32_0 : i32, i32
  }
  func.func @transform_9(%arg0: i32) -> (i32, i32) {
    %c0_i32 = arith.constant 0 : i32
    %c0_i32_0 = arith.constant 0 : i32
    %c0_i32_1 = arith.constant 0 : i32
    return %c0_i32, %c0_i32_0 : i32, i32
  }
  func.func @transform_10(%arg0: i32) -> (i32, i32) {
    %c0_i32 = arith.constant 0 : i32
    %c0_i32_0 = arith.constant 0 : i32
    %c0_i32_1 = arith.constant 0 : i32
    return %c0_i32, %c0_i32_0 : i32, i32
  }
  func.func @transform_11(%arg0: i32) -> (i32, i32, i32) {
    %c0_i32 = arith.constant 0 : i32
    %c0_i32_0 = arith.constant 0 : i32
    %c0_i32_1 = arith.constant 0 : i32
    return %arg0, %c0_i32, %c0_i32_0 : i32, i32, i32
  }
}

</mosaic_0001>

<llo_original>
// kernel: tpu_custom_call.1
$region0: #{tpu_custom_call.1}
  #allocation0 [shape = 'u32[]', space=smem, size = 0x4, offset = 0x4, fixed_abs, tag = 'smem constant byte address 0x4 - core index']
  #allocation1 [shape = 'u32[144,128]{1,0:T(1,128)}', space=vmem, size = 0x12000, scoped, tag = 'internal scratch']
  %s0 = inlined_call_operand.vmem [shape: bf16[2,8,16], index: 0, kind: input, shape index: {}]
  %s1 = inlined_call_operand.vmem [shape: bf16[2,8,16], index: 1, kind: input, shape index: {}]
  %s2 = inlined_call_operand.vmem [shape: bf16[2,8,16], index: 2, kind: input, shape index: {}]
  %s3 = inlined_call_operand.vmem [shape: bf16[16,128], index: 3, kind: input, shape index: {}]
  %s4 = inlined_call_operand.vmem [shape: f32[1,128], index: 4, kind: input, shape index: {}]
  %s5 = inlined_call_operand.vmem [shape: bf16[16,128], index: 5, kind: input, shape index: {}]
  %s6 = inlined_call_operand.vmem [shape: f32[1,128], index: 6, kind: input, shape index: {}]
  %s7 = inlined_call_operand.vmem [shape: bf16[16,128], index: 7, kind: input, shape index: {}]
  %s8 = inlined_call_operand.vmem [shape: f32[1,128], index: 8, kind: input, shape index: {}]
  %s9 = inlined_call_operand.vmem [shape: bf16[128,16], index: 9, kind: input, shape index: {}]
  %s10 = inlined_call_operand.vmem [shape: f32[1,16], index: 10, kind: input, shape index: {}]
  %s11 = inlined_call_operand.hbm [shape: f32[2,8,16], index: 11, kind: output, shape index: {}]
  %s12 = sld [smem:[#allocation0]]
  $region77: #{tpu_custom_call.1} parent=0
    _
  %s14 = ssub.s32 1, %s12
  %s15 = scalar_select 0, %s14, %s12
  $region1: #{tpu_custom_call.1} parent=0
    #allocation2 [shape = 'u8[8192]{0}', space=vmem, size = 0x2000, scoped, tag = 'output window, operand 0']
    #allocation3 [shape = 's32[2]{0}', space=sflag, size = 0x8, scoped, tag = 'scoped memory for tpu_custom_call.1']
    %16 = vsyncpa [#allocation3], 0
    %s17 = scalar_lea.sflag [#allocation3], 1
    %18 = vsyncpa %s17, 0
    loop: start=0, step=1, limit=4
    $region2: #{tpu_custom_call.1} parent=1 // loop_pre_header
      _
    $region3: #{tpu_custom_call.1} parent=1 // loop_header
      %s20 = sphi 0, %s24
      %p21 = scmp.ge.s32.totalorder %s20, 4
      %s30 = sphi 0, %s32
      %s33 = sphi 0, %s30
      %s34 = sphi 0, %s33
      %s50 = sphi 0, %s34
      %s56 = sphi 0, %s58
      %s59 = sphi 0, %s56
      %s60 = sphi 0, %s59
      %s76 = sphi 0, %s60
      %s82 = sphi 0, %s84
      %s85 = sphi 0, %s82
      %s86 = sphi 0, %s85
      %s102 = sphi 0, %s86
      %s106 = sphi 0, %s106
      %s108 = sphi 0, %s106
      %s109 = sphi 0, %s108
      %s123 = sphi 0, %s109
      %s127 = sphi 0, %s127
      %s129 = sphi 0, %s127
      %s130 = sphi 0, %s129
      %s144 = sphi 0, %s130
      %s148 = sphi 0, %s148
      %s150 = sphi 0, %s148
      %s151 = sphi 0, %s150
      %s165 = sphi 0, %s151
      %s169 = sphi 0, %s169
      %s171 = sphi 0, %s169
      %s172 = sphi 0, %s171
      %s186 = sphi 0, %s172
      %s190 = sphi 0, %s190
      %s192 = sphi 0, %s190
      %s193 = sphi 0, %s192
      %s207 = sphi 0, %s193
      %s211 = sphi 0, %s211
      %s213 = sphi 0, %s211
      %s214 = sphi 0, %s213
      %s228 = sphi 0, %s214
      %s232 = sphi 0, %s232
      %s234 = sphi 0, %s232
      %s235 = sphi 0, %s234
      %s249 = sphi 0, %s235
      %s253 = sphi 0, %s253
      %s255 = sphi 0, %s253
      %s256 = sphi 0, %s255
      %s270 = sphi 0, %s256
      %s276 = sphi 0, %s278
      %s279 = sphi 0, %s276
      %s280 = sphi 0, %s279
      %s296 = sphi 0, %s280
    $region4: #{tpu_custom_call.1} parent=1 // loop_header_branch
      %23 = sbr.rel (%p21) target = $region8
    $region5: #{tpu_custom_call.1} parent=1 // loop_body
      %s25 = ssub.s32 %s20, 1
      %s26 = ssub.s32 %s20, 2
      %s27 = sadd.s32 %s20, 1
      %s28 = ssub.s32 %s20, %s27
      %p29 = scmp.eq.s32.totalorder %s28, 0
      %s31 = sadd.s32 %s30, 1
      %s32 = scalar_select %p29, %s30, %s31
      %p35 = pneg %p29
      %p36 = scmp.eq.s32.totalorder %s20, 1
      %p37 = por %p35, %p36
      %p38 = scmp.ne.s32.totalorder %s30, %s33
      %p39 = scmp.eq.s32.totalorder %s20, 0
      %p40 = por %p38, %p39
      %p41 = scmp.ne.s32.totalorder %s30, %s33
      %p42 = scmp.eq.s32.totalorder %s25, 1
      %p43 = por %p41, %p42
      %p44 = scmp.ne.s32.totalorder %s33, %s34
      %p45 = scmp.eq.s32.totalorder %s25, 0
      %p46 = por %p44, %p45
      %p47 = scmp.ne.s32.totalorder %s33, %s34
      %p48 = scmp.eq.s32.totalorder %s26, 1
      %p49 = por %p47, %p48
      %p51 = scmp.ne.s32.totalorder %s34, %s50
      %p52 = scmp.eq.s32.totalorder %s26, 0
      %p53 = por %p51, %p52
      %s54 = ssub.s32 %s20, %s27
      %p55 = scmp.eq.s32.totalorder %s54, 0
      %s57 = sadd.s32 %s56, 1
      %s58 = scalar_select %p55, %s56, %s57
      %p61 = pneg %p55
      %p62 = scmp.eq.s32.totalorder %s20, 1
      %p63 = por %p61, %p62
      %p64 = scmp.ne.s32.totalorder %s56, %s59
      %p65 = scmp.eq.s32.totalorder %s20, 0
      %p66 = por %p64, %p65
      %p67 = scmp.ne.s32.totalorder %s56, %s59
      %p68 = scmp.eq.s32.totalorder %s25, 1
      %p69 = por %p67, %p68
      %p70 = scmp.ne.s32.totalorder %s59, %s60
      %p71 = scmp.eq.s32.totalorder %s25, 0
      %p72 = por %p70, %p71
      %p73 = scmp.ne.s32.totalorder %s59, %s60
      %p74 = scmp.eq.s32.totalorder %s26, 1
      %p75 = por %p73, %p74
      %p77 = scmp.ne.s32.totalorder %s60, %s76
      %p78 = scmp.eq.s32.totalorder %s26, 0
      %p79 = por %p77, %p78
      %s80 = ssub.s32 %s20, %s27
      %p81 = scmp.eq.s32.totalorder %s80, 0
      %s83 = sadd.s32 %s82, 1
      %s84 = scalar_select %p81, %s82, %s83
      %p87 = pneg %p81
      %p88 = scmp.eq.s32.totalorder %s20, 1
      %p89 = por %p87, %p88
      %p90 = scmp.ne.s32.totalorder %s82, %s85
      %p91 = scmp.eq.s32.totalorder %s20, 0
      %p92 = por %p90, %p91
      %p93 = scmp.ne.s32.totalorder %s82, %s85
      %p94 = scmp.eq.s32.totalorder %s25, 1
      %p95 = por %p93, %p94
      %p96 = scmp.ne.s32.totalorder %s85, %s86
      %p97 = scmp.eq.s32.totalorder %s25, 0
      %p98 = por %p96, %p97
      %p99 = scmp.ne.s32.totalorder %s85, %s86
      %p100 = scmp.eq.s32.totalorder %s26, 1
      %p101 = por %p99, %p100
      %p103 = scmp.ne.s32.totalorder %s86, %s102
      %p104 = scmp.eq.s32.totalorder %s26, 0
      %p105 = por %p103, %p104
      %s107 = sadd.s32 %s106, 1
      %p110 = scmp.eq.s32.totalorder %s20, 1
      %p111 = scmp.ne.s32.totalorder %s106, %s108
      %p112 = scmp.eq.s32.totalorder %s20, 0
      %p113 = por %p111, %p112
      %p114 = scmp.ne.s32.totalorder %s106, %s108
      %p115 = scmp.eq.s32.totalorder %s25, 1
      %p116 = por %p114, %p115
      %p117 = scmp.ne.s32.totalorder %s108, %s109
      %p118 = scmp.eq.s32.totalorder %s25, 0
      %p119 = por %p117, %p118
      %p120 = scmp.ne.s32.totalorder %s108, %s109
      %p121 = scmp.eq.s32.totalorder %s26, 1
      %p122 = por %p120, %p121
      %p124 = scmp.ne.s32.totalorder %s109, %s123
      %p125 = scmp.eq.s32.totalorder %s26, 0
      %p126 = por %p124, %p125
      %s128 = sadd.s32 %s127, 1
      %p131 = scmp.eq.s32.totalorder %s20, 1
      %p132 = scmp.ne.s32.totalorder %s127, %s129
      %p133 = scmp.eq.s32.totalorder %s20, 0
      %p134 = por %p132, %p133
      %p135 = scmp.ne.s32.totalorder %s127, %s129
      %p136 = scmp.eq.s32.totalorder %s25, 1
      %p137 = por %p135, %p136
      %p138 = scmp.ne.s32.totalorder %s129, %s130
      %p139 = scmp.eq.s32.totalorder %s25, 0
      %p140 = por %p138, %p139
      %p141 = scmp.ne.s32.totalorder %s129, %s130
      %p142 = scmp.eq.s32.totalorder %s26, 1
      %p143 = por %p141, %p142
      %p145 = scmp.ne.s32.totalorder %s130, %s144
      %p146 = scmp.eq.s32.totalorder %s26, 0
      %p147 = por %p145, %p146
      %s149 = sadd.s32 %s148, 1
      %p152 = scmp.eq.s32.totalorder %s20, 1
      %p153 = scmp.ne.s32.totalorder %s148, %s150
      %p154 = scmp.eq.s32.totalorder %s20, 0
      %p155 = por %p153, %p154
      %p156 = scmp.ne.s32.totalorder %s148, %s150
      %p157 = scmp.eq.s32.totalorder %s25, 1
      %p158 = por %p156, %p157
      %p159 = scmp.ne.s32.totalorder %s150, %s151
      %p160 = scmp.eq.s32.totalorder %s25, 0
      %p161 = por %p159, %p160
      %p162 = scmp.ne.s32.totalorder %s150, %s151
      %p163 = scmp.eq.s32.totalorder %s26, 1
      %p164 = por %p162, %p163
      %p166 = scmp.ne.s32.totalorder %s151, %s165
      %p167 = scmp.eq.s32.totalorder %s26, 0
      %p168 = por %p166, %p167
      %s170 = sadd.s32 %s169, 1
      %p173 = scmp.eq.s32.totalorder %s20, 1
      %p174 = scmp.ne.s32.totalorder %s169, %s171
      %p175 = scmp.eq.s32.totalorder %s20, 0
      %p176 = por %p174, %p175
      %p177 = scmp.ne.s32.totalorder %s169, %s171
      %p178 = scmp.eq.s32.totalorder %s25, 1
      %p179 = por %p177, %p178
      %p180 = scmp.ne.s32.totalorder %s171, %s172
      %p181 = scmp.eq.s32.totalorder %s25, 0
      %p182 = por %p180, %p181
      %p183 = scmp.ne.s32.totalorder %s171, %s172
      %p184 = scmp.eq.s32.totalorder %s26, 1
      %p185 = por %p183, %p184
      %p187 = scmp.ne.s32.totalorder %s172, %s186
      %p188 = scmp.eq.s32.totalorder %s26, 0
      %p189 = por %p187, %p188
      %s191 = sadd.s32 %s190, 1
      %p194 = scmp.eq.s32.totalorder %s20, 1
      %p195 = scmp.ne.s32.totalorder %s190, %s192
      %p196 = scmp.eq.s32.totalorder %s20, 0
      %p197 = por %p195, %p196
      %p198 = scmp.ne.s32.totalorder %s190, %s192
      %p199 = scmp.eq.s32.totalorder %s25, 1
      %p200 = por %p198, %p199
      %p201 = scmp.ne.s32.totalorder %s192, %s193
      %p202 = scmp.eq.s32.totalorder %s25, 0
      %p203 = por %p201, %p202
      %p204 = scmp.ne.s32.totalorder %s192, %s193
      %p205 = scmp.eq.s32.totalorder %s26, 1
      %p206 = por %p204, %p205
      %p208 = scmp.ne.s32.totalorder %s193, %s207
      %p209 = scmp.eq.s32.totalorder %s26, 0
      %p210 = por %p208, %p209
      %s212 = sadd.s32 %s211, 1
      %p215 = scmp.eq.s32.totalorder %s20, 1
      %p216 = scmp.ne.s32.totalorder %s211, %s213
      %p217 = scmp.eq.s32.totalorder %s20, 0
      %p218 = por %p216, %p217
      %p219 = scmp.ne.s32.totalorder %s211, %s213
      %p220 = scmp.eq.s32.totalorder %s25, 1
      %p221 = por %p219, %p220
      %p222 = scmp.ne.s32.totalorder %s213, %s214
      %p223 = scmp.eq.s32.totalorder %s25, 0
      %p224 = por %p222, %p223
      %p225 = scmp.ne.s32.totalorder %s213, %s214
      %p226 = scmp.eq.s32.totalorder %s26, 1
      %p227 = por %p225, %p226
      %p229 = scmp.ne.s32.totalorder %s214, %s228
      %p230 = scmp.eq.s32.totalorder %s26, 0
      %p231 = por %p229, %p230
      %s233 = sadd.s32 %s232, 1
      %p236 = scmp.eq.s32.totalorder %s20, 1
      %p237 = scmp.ne.s32.totalorder %s232, %s234
      %p238 = scmp.eq.s32.totalorder %s20, 0
      %p239 = por %p237, %p238
      %p240 = scmp.ne.s32.totalorder %s232, %s234
      %p241 = scmp.eq.s32.totalorder %s25, 1
      %p242 = por %p240, %p241
      %p243 = scmp.ne.s32.totalorder %s234, %s235
      %p244 = scmp.eq.s32.totalorder %s25, 0
      %p245 = por %p243, %p244
      %p246 = scmp.ne.s32.totalorder %s234, %s235
      %p247 = scmp.eq.s32.totalorder %s26, 1
      %p248 = por %p246, %p247
      %p250 = scmp.ne.s32.totalorder %s235, %s249
      %p251 = scmp.eq.s32.totalorder %s26, 0
      %p252 = por %p250, %p251
      %s254 = sadd.s32 %s253, 1
      %p257 = scmp.eq.s32.totalorder %s20, 1
      %p258 = scmp.ne.s32.totalorder %s253, %s255
      %p259 = scmp.eq.s32.totalorder %s20, 0
      %p260 = por %p258, %p259
      %p261 = scmp.ne.s32.totalorder %s253, %s255
      %p262 = scmp.eq.s32.totalorder %s25, 1
      %p263 = por %p261, %p262
      %p264 = scmp.ne.s32.totalorder %s255, %s256
      %p265 = scmp.eq.s32.totalorder %s25, 0
      %p266 = por %p264, %p265
      %p267 = scmp.ne.s32.totalorder %s255, %s256
      %p268 = scmp.eq.s32.totalorder %s26, 1
      %p269 = por %p267, %p268
      %p271 = scmp.ne.s32.totalorder %s256, %s270
      %p272 = scmp.eq.s32.totalorder %s26, 0
      %p273 = por %p271, %p272
      %s274 = ssub.s32 %s20, %s27
      %p275 = scmp.eq.s32.totalorder %s274, 0
      %s277 = sadd.s32 %s276, 1
      %s278 = scalar_select %p275, %s276, %s277
      %p281 = pneg %p275
      %p282 = scmp.eq.s32.totalorder %s20, 1
      %p283 = por %p281, %p282
      %p284 = scmp.ne.s32.totalorder %s276, %s279
      %p285 = scmp.eq.s32.totalorder %s20, 0
      %p286 = por %p284, %p285
      %p287 = scmp.ne.s32.totalorder %s276, %s279
      %p288 = scmp.eq.s32.totalorder %s25, 1
      %p289 = por %p287, %p288
      %p290 = scmp.ne.s32.totalorder %s279, %s280
      %p291 = scmp.eq.s32.totalorder %s25, 0
      %p292 = por %p290, %p291
      %p293 = scmp.ne.s32.totalorder %s279, %s280
      %p294 = scmp.eq.s32.totalorder %s26, 1
      %p295 = por %p293, %p294
      %p297 = scmp.ne.s32.totalorder %s280, %s296
      %p298 = scmp.eq.s32.totalorder %s26, 0
      %p299 = por %p297, %p298
      %p300 = scmp.le.s32.totalorder 1, %s20
      %p301 = scmp.lt.s32.totalorder %s20, 3
      %p302 = pnand %p300, %p301
      %p303 = pneg %p302
      // Predicated region
      $region9: #{tpu_custom_call.1} parent=5 // pred_check
        _
      $region10: #{tpu_custom_call.1} parent=5 // pred_check_branch
        %305 = sbr.rel (%p302) target = $region12
      $region11: #{tpu_custom_call.1} parent=5 // pred_region
        %s306 = ssub.s32 %s20, 1
        // Predicated region
        $region13: #{tpu_custom_call.1} parent=11 // pred_check
          %p307 = pneg %p119
        $region14: #{tpu_custom_call.1} parent=11 // pred_check_branch
          %309 = sbr.rel (%p307) target = $region16
        $region15: #{tpu_custom_call.1} parent=11 // pred_region
          _
        $region16: #{tpu_custom_call.1} parent=11 // pred_fallthru
          _
        // Predicated region
        $region17: #{tpu_custom_call.1} parent=11 // pred_check
          %p310 = pneg %p140
        $region18: #{tpu_custom_call.1} parent=11 // pred_check_branch
          %312 = sbr.rel (%p310) target = $region20
        $region19: #{tpu_custom_call.1} parent=11 // pred_region
          _
        $region20: #{tpu_custom_call.1} parent=11 // pred_fallthru
          _
        // Predicated region
        $region21: #{tpu_custom_call.1} parent=11 // pred_check
          %p313 = pneg %p161
        $region22: #{tpu_custom_call.1} parent=11 // pred_check_branch
          %315 = sbr.rel (%p313) target = $region24
        $region23: #{tpu_custom_call.1} parent=11 // pred_region
          _
        $region24: #{tpu_custom_call.1} parent=11 // pred_fallthru
          _
        // Predicated region
        $region25: #{tpu_custom_call.1} parent=11 // pred_check
          %p316 = pneg %p182
        $region26: #{tpu_custom_call.1} parent=11 // pred_check_branch
          %318 = sbr.rel (%p316) target = $region28
        $region27: #{tpu_custom_call.1} parent=11 // pred_region
          _
        $region28: #{tpu_custom_call.1} parent=11 // pred_fallthru
          _
        // Predicated region
        $region29: #{tpu_custom_call.1} parent=11 // pred_check
          %p319 = pneg %p203
        $region30: #{tpu_custom_call.1} parent=11 // pred_check_branch
          %321 = sbr.rel (%p319) target = $region32
        $region31: #{tpu_custom_call.1} parent=11 // pred_region
          _
        $region32: #{tpu_custom_call.1} parent=11 // pred_fallthru
          _
        // Predicated region
        $region33: #{tpu_custom_call.1} parent=11 // pred_check
          %p322 = pneg %p224
        $region34: #{tpu_custom_call.1} parent=11 // pred_check_branch
          %324 = sbr.rel (%p322) target = $region36
        $region35: #{tpu_custom_call.1} parent=11 // pred_region
          _
        $region36: #{tpu_custom_call.1} parent=11 // pred_fallthru
          _
        // Predicated region
        $region37: #{tpu_custom_call.1} parent=11 // pred_check
          %p325 = pneg %p245
        $region38: #{tpu_custom_call.1} parent=11 // pred_check_branch
          %327 = sbr.rel (%p325) target = $region40
        $region39: #{tpu_custom_call.1} parent=11 // pred_region
          _
        $region40: #{tpu_custom_call.1} parent=11 // pred_fallthru
          _
        // Predicated region
        $region41: #{tpu_custom_call.1} parent=11 // pred_check
          %p328 = pneg %p266
        $region42: #{tpu_custom_call.1} parent=11 // pred_check_branch
          %330 = sbr.rel (%p328) target = $region44
        $region43: #{tpu_custom_call.1} parent=11 // pred_region
          _
        $region44: #{tpu_custom_call.1} parent=11 // pred_fallthru
          _
      $region12: #{tpu_custom_call.1} parent=5 // pred_fallthru
        _
      %p331 = scmp.lt.s32.totalorder %s20, 2
      // Predicated region
      $region45: #{tpu_custom_call.1} parent=5 // pred_check
        %p332 = pneg %p331
      $region46: #{tpu_custom_call.1} parent=5 // pred_check_branch
        %334 = sbr.rel (%p332) target = $region48
      $region47: #{tpu_custom_call.1} parent=5 // pred_region
        // Predicated region
        $region49: #{tpu_custom_call.1} parent=47 // pred_check
          %p335 = pneg %p40
        $region50: #{tpu_custom_call.1} parent=47 // pred_check_branch
          %337 = sbr.rel (%p335) target = $region52
        $region51: #{tpu_custom_call.1} parent=47 // pred_region
          %p338 = scmp.lt.s32.totalorder %s20, 1
          %s339 = scalar_select %p338, %s20, 1
          %s340 = smul.addr %s339, 4
          %s341 = scalar_lea.vmem %s0, %s340
        $region52: #{tpu_custom_call.1} parent=47 // pred_fallthru
          _
        // Predicated region
        $region53: #{tpu_custom_call.1} parent=47 // pred_check
          %p342 = pneg %p66
        $region54: #{tpu_custom_call.1} parent=47 // pred_check_branch
          %344 = sbr.rel (%p342) target = $region56
        $region55: #{tpu_custom_call.1} parent=47 // pred_region
          %p345 = scmp.lt.s32.totalorder %s20, 1
          %s346 = scalar_select %p345, %s20, 1
          %s347 = smul.addr %s346, 4
          %s348 = scalar_lea.vmem %s1, %s347
        $region56: #{tpu_custom_call.1} parent=47 // pred_fallthru
          _
        // Predicated region
        $region57: #{tpu_custom_call.1} parent=47 // pred_check
          %p349 = pneg %p92
        $region58: #{tpu_custom_call.1} parent=47 // pred_check_branch
          %351 = sbr.rel (%p349) target = $region60
        $region59: #{tpu_custom_call.1} parent=47 // pred_region
          %p352 = scmp.lt.s32.totalorder %s20, 1
          %s353 = scalar_select %p352, %s20, 1
          %s354 = smul.addr %s353, 4
          %s355 = scalar_lea.vmem %s2, %s354
        $region60: #{tpu_custom_call.1} parent=47 // pred_fallthru
          _
      $region48: #{tpu_custom_call.1} parent=5 // pred_fallthru
        _
      %p356 = scmp.le.s32.totalorder 1, %s20
      %p357 = scmp.lt.s32.totalorder %s20, 3
      %p358 = pnand %p356, %p357
      %p359 = pneg %p358
      // Predicated region
      $region61: #{tpu_custom_call.1} parent=5 // pred_check
        _
      $region62: #{tpu_custom_call.1} parent=5 // pred_check_branch
        %361 = sbr.rel (%p358) target = $region64
      $region63: #{tpu_custom_call.1} parent=5 // pred_region
        %s362 = ssub.s32 %s20, 1
        %p363 = scmp.lt.s32.totalorder %s25, 1
        %s364 = scalar_select %p363, %s25, 1
        %s365 = smul.addr %s364, 4
        %s366 = scalar_lea.vmem %s0, %s365
        %p367 = pneg %p46
        %p368 = pneg %p43
        %p369 = scmp.lt.s32.totalorder %s25, 1
        %s370 = scalar_select %p369, %s25, 1
        %s371 = smul.addr %s370, 4
        %s372 = scalar_lea.vmem %s1, %s371
        %p373 = pneg %p72
        %p374 = pneg %p69
        %p375 = scmp.lt.s32.totalorder %s25, 1
        %s376 = scalar_select %p375, %s25, 1
        %s377 = smul.addr %s376, 4
        %s378 = scalar_lea.vmem %s2, %s377
        %p379 = pneg %p98
        %p380 = pneg %p95
        %p381 = pneg %p119
        %p382 = pneg %p116
        %p383 = pneg %p140
        %p384 = pneg %p137
        %p385 = pneg %p161
        %p386 = pneg %p158
        %p387 = pneg %p182
        %p388 = pneg %p179
        %p389 = pneg %p203
        %p390 = pneg %p200
        %p391 = pneg %p224
        %p392 = pneg %p221
        %p393 = pneg %p245
        %p394 = pneg %p242
        %p395 = pneg %p266
        %p396 = pneg %p263
        %p397 = pneg %p292
        %p398 = pneg %p289
        %s399 = sand.u32 %s279, 1
        %s400 = scalar_lea.sflag [#allocation3], %s399
        %s401 = sand.u32 %s279, 1
        %s402 = smul.addr %s401, 8
        %s403 = scalar_lea.vmem [#allocation2], %s402
        %p404 = scmp.lt.s32.totalorder %s25, 1
        %s405 = scalar_select %p404, %s25, 1
        %s406 = smul.addr %s405, 4
        %s407 = scalar_lea.vmem %s0, %s406
        %p408 = scmp.lt.s32.totalorder %s25, 1
        %s409 = scalar_select %p408, %s25, 1
        %s410 = smul.addr %s409, 4
        %s411 = scalar_lea.vmem %s1, %s410
        %p412 = scmp.lt.s32.totalorder %s25, 1
        %s413 = scalar_select %p412, %s25, 1
        %s414 = smul.addr %s413, 4
        %s415 = scalar_lea.vmem %s2, %s414
        %v417 = vld [vmem:[%s407] sm:$0xf]
        %v418 = vld [vmem:[%s411] sm:$0xf]
        %v419 = vld [vmem:[%s415] sm:$0xf]
        %v420 = vld [vmem:[%s3] sm:$0xf]
        %v421 = vld [vmem:[%s3 + $0x4] sm:$0xf]
        %v422 = vld [vmem:[%s4] sm:$0x1]
        %v424 = vlaneseq
        %v425 = vshrl.u32 %v424, 7
        %v426 = vsub.s32 0, %v425
        %v427 = vrot.slane %v422, %v426
        %v431 = vunpack.c.l.b16 %v420
        %v432 = vunpack.c.l.b16 %v421
        %v433 = vpack.c.b16 %v432, %v431
        %vm435 = vcmask 130048
        %v437 = vsel %vm435, %v417, 0
        %439 = vmatprep.subr.bf16.mxu0 0
        %440 = vmatpush1.bf16.msra.mxu0 0
        %441 = vmatprep.subr.bf16.mxu0 0
        %442 = vmatpush1.bf16.msra.mxu0 0
        %443 = vmatprep.subr.bf16.mxu0 0
        %444 = vmatpush1.bf16.msra.mxu0 0
        %445 = vmatprep.subr.bf16.mxu0 0
        %446 = vmatpush1.bf16.msra.mxu0 0
        %447 = vmatprep.subr.bf16.mxu0 0
        %448 = vmatpush1.bf16.msra.mxu0 0
        %449 = vmatprep.subr.bf16.mxu0 0
        %450 = vmatpush1.bf16.msra.mxu0 0
        %451 = vmatprep.subr.bf16.mxu0 0
        %452 = vmatpush1.bf16.msra.mxu0 0
        %453 = vmatprep.subr.bf16.mxu0 0
        %454 = vmatpush1.bf16.msra.mxu0 %v433
        %455 = vmatprep.subr.bf16.mxu0 0
        %456 = vmatpush2.bf16.msra.mxu0 0
        %457 = vmatprep.subr.bf16.mxu0 0
        %458 = vmatpush2.bf16.msra.mxu0 0
        %459 = vmatprep.subr.bf16.mxu0 0
        %460 = vmatpush2.bf16.msra.mxu0 0
        %461 = vmatprep.subr.bf16.mxu0 0
        %462 = vmatpush2.bf16.msra.mxu0 0
        %463 = vmatprep.subr.bf16.mxu0 0
        %464 = vmatpush2.bf16.msra.mxu0 0
        %465 = vmatprep.subr.bf16.mxu0 0
        %466 = vmatpush2.bf16.msra.mxu0 0
        %467 = vmatprep.subr.bf16.mxu0 0
        %468 = vmatpush2.bf16.msra.mxu0 0
        %469 = vmatprep.subr.bf16.mxu0 0
        %470 = vmatpush2.bf16.msra.mxu0 0
        %471 = vmatprep.mubr.bf16.mxu0 0
        %472 = vmatmul.mubr.bf16.gmra.mxu0 %v437
        %v473 = vpop.f32.mrf.mxu0
        %v474 = vadd.f32 %v427, %v473
        %v475 = vpop.f32.mrf.mxu0
        %v476 = vpop.f32.mrf.mxu0
        %v477 = vpop.f32.mrf.mxu0
        %478 = vdwg.mxu0
        %v479 = vld [vmem:[%s5] sm:$0xf]
        %v480 = vld [vmem:[%s5 + $0x4] sm:$0xf]
        %v481 = vld [vmem:[%s6] sm:$0x1]
        %v483 = vlaneseq
        %v484 = vshrl.u32 %v483, 7
        %v485 = vsub.s32 0, %v484
        %v486 = vrot.slane %v481, %v485
        %v490 = vunpack.c.l.b16 %v479
        %v491 = vunpack.c.l.b16 %v480
        %v492 = vpack.c.b16 %v491, %v490
        %v495 = vsel %vm435, %v418, 0
        %497 = vmatprep.subr.bf16.mxu0 0
        %498 = vmatpush1.bf16.msra.mxu0 0
        %499 = vmatprep.subr.bf16.mxu0 0
        %500 = vmatpush1.bf16.msra.mxu0 0
        %501 = vmatprep.subr.bf16.mxu0 0
        %502 = vmatpush1.bf16.msra.mxu0 0
        %503 = vmatprep.subr.bf16.mxu0 0
        %504 = vmatpush1.bf16.msra.mxu0 0
        %505 = vmatprep.subr.bf16.mxu0 0
        %506 = vmatpush1.bf16.msra.mxu0 0
        %507 = vmatprep.subr.bf16.mxu0 0
        %508 = vmatpush1.bf16.msra.mxu0 0
        %509 = vmatprep.subr.bf16.mxu0 0
        %510 = vmatpush1.bf16.msra.mxu0 0
        %511 = vmatprep.subr.bf16.mxu0 0
        %512 = vmatpush1.bf16.msra.mxu0 %v492
        %513 = vmatprep.subr.bf16.mxu0 0
        %514 = vmatpush2.bf16.msra.mxu0 0
        %515 = vmatprep.subr.bf16.mxu0 0
        %516 = vmatpush2.bf16.msra.mxu0 0
        %517 = vmatprep.subr.bf16.mxu0 0
        %518 = vmatpush2.bf16.msra.mxu0 0
        %519 = vmatprep.subr.bf16.mxu0 0
        %520 = vmatpush2.bf16.msra.mxu0 0
        %521 = vmatprep.subr.bf16.mxu0 0
        %522 = vmatpush2.bf16.msra.mxu0 0
        %523 = vmatprep.subr.bf16.mxu0 0
        %524 = vmatpush2.bf16.msra.mxu0 0
        %525 = vmatprep.subr.bf16.mxu0 0
        %526 = vmatpush2.bf16.msra.mxu0 0
        %527 = vmatprep.subr.bf16.mxu0 0
        %528 = vmatpush2.bf16.msra.mxu0 0
        %529 = vmatprep.mubr.bf16.mxu0 0
        %530 = vmatmul.mubr.bf16.gmra.mxu0 %v495
        %v531 = vpop.f32.mrf.mxu0
        %v532 = vadd.f32 %v486, %v531
        %v533 = vpop.f32.mrf.mxu0
        %v534 = vpop.f32.mrf.mxu0
        %v535 = vpop.f32.mrf.mxu0
        %536 = vdwg.mxu0
        %v537 = vld [vmem:[%s7] sm:$0xf]
        %v538 = vld [vmem:[%s7 + $0x4] sm:$0xf]
        %v539 = vld [vmem:[%s8] sm:$0x1]
        %v541 = vlaneseq
        %v542 = vshrl.u32 %v541, 7
        %v543 = vsub.s32 0, %v542
        %v544 = vrot.slane %v539, %v543
        %v548 = vunpack.c.l.b16 %v537
        %v549 = vunpack.c.l.b16 %v538
        %v550 = vpack.c.b16 %v549, %v548
        %v553 = vsel %vm435, %v419, 0
        %555 = vmatprep.subr.bf16.mxu0 0
        %556 = vmatpush1.bf16.msra.mxu0 0
        %557 = vmatprep.subr.bf16.mxu0 0
        %558 = vmatpush1.bf16.msra.mxu0 0
        %559 = vmatprep.subr.bf16.mxu0 0
        %560 = vmatpush1.bf16.msra.mxu0 0
        %561 = vmatprep.subr.bf16.mxu0 0
        %562 = vmatpush1.bf16.msra.mxu0 0
        %563 = vmatprep.subr.bf16.mxu0 0
        %564 = vmatpush1.bf16.msra.mxu0 0
        %565 = vmatprep.subr.bf16.mxu0 0
        %566 = vmatpush1.bf16.msra.mxu0 0
        %567 = vmatprep.subr.bf16.mxu0 0
        %568 = vmatpush1.bf16.msra.mxu0 0
        %569 = vmatprep.subr.bf16.mxu0 0
        %570 = vmatpush1.bf16.msra.mxu0 %v550
        %571 = vmatprep.subr.bf16.mxu0 0
        %572 = vmatpush2.bf16.msra.mxu0 0
        %573 = vmatprep.subr.bf16.mxu0 0
        %574 = vmatpush2.bf16.msra.mxu0 0
        %575 = vmatprep.subr.bf16.mxu0 0
        %576 = vmatpush2.bf16.msra.mxu0 0
        %577 = vmatprep.subr.bf16.mxu0 0
        %578 = vmatpush2.bf16.msra.mxu0 0
        %579 = vmatprep.subr.bf16.mxu0 0
        %580 = vmatpush2.bf16.msra.mxu0 0
        %581 = vmatprep.subr.bf16.mxu0 0
        %582 = vmatpush2.bf16.msra.mxu0 0
        %583 = vmatprep.subr.bf16.mxu0 0
        %584 = vmatpush2.bf16.msra.mxu0 0
        %585 = vmatprep.subr.bf16.mxu0 0
        %586 = vmatpush2.bf16.msra.mxu0 0
        %587 = vmatprep.mubr.bf16.mxu0 0
        %588 = vmatmul.mubr.bf16.gmra.mxu0 %v553
        %v589 = vpop.f32.mrf.mxu0
        %v590 = vadd.f32 %v544, %v589
        %v591 = vpop.f32.mrf.mxu0
        %v592 = vpop.f32.mrf.mxu0
        %v593 = vpop.f32.mrf.mxu0
        %594 = vdwg.mxu0
        %v595 = vpack.c.bf16 %v474, %v474
        %v596 = vpack.c.bf16 %v532, %v532
        %v597 = vpack.c.bf16 %v590, %v590
        %598 = vmatprep.subr.bf16.mxu0 0
        %599 = vmatpush1.bf16.xpose.msra.mxu0 0
        %600 = vmatprep.subr.bf16.mxu0 0
        %601 = vmatpush1.bf16.xpose.msra.mxu0 0
        %602 = vmatprep.subr.bf16.mxu0 0
        %603 = vmatpush1.bf16.xpose.msra.mxu0 0
        %604 = vmatprep.subr.bf16.mxu0 0
        %605 = vmatpush1.bf16.xpose.msra.mxu0 0
        %606 = vmatprep.subr.bf16.mxu0 0
        %607 = vmatpush1.bf16.xpose.msra.mxu0 0
        %608 = vmatprep.subr.bf16.mxu0 0
        %609 = vmatpush1.bf16.xpose.msra.mxu0 0
        %610 = vmatprep.subr.bf16.mxu0 0
        %611 = vmatpush1.bf16.xpose.msra.mxu0 0
        %612 = vmatprep.subr.bf16.mxu0 0
        %613 = vmatpush1.bf16.xpose.msra.mxu0 %v596
        %614 = vmatprep.subr.bf16.mxu0 0
        %615 = vmatpush2.bf16.xpose.msra.mxu0 0
        %616 = vmatprep.subr.bf16.mxu0 0
        %617 = vmatpush2.bf16.xpose.msra.mxu0 0
        %618 = vmatprep.subr.bf16.mxu0 0
        %619 = vmatpush2.bf16.xpose.msra.mxu0 0
        %620 = vmatprep.subr.bf16.mxu0 0
        %621 = vmatpush2.bf16.xpose.msra.mxu0 0
        %622 = vmatprep.subr.bf16.mxu0 0
        %623 = vmatpush2.bf16.xpose.msra.mxu0 0
        %624 = vmatprep.subr.bf16.mxu0 0
        %625 = vmatpush2.bf16.xpose.msra.mxu0 0
        %626 = vmatprep.subr.bf16.mxu0 0
        %627 = vmatpush2.bf16.xpose.msra.mxu0 0
        %628 = vmatprep.subr.bf16.mxu0 0
        %629 = vmatpush2.bf16.xpose.msra.mxu0 0
        %630 = vmatprep.mubr.bf16.mxu0 0
        %631 = vmatmul.mubr.bf16.gmra.mxu0 %v595
        %v632 = vpop.f32.mrf.mxu0
        %v633 = vadd.f32 0.0, %v632
        %v634 = vpop.f32.mrf.mxu0
        %v635 = vpop.f32.mrf.mxu0
        %v636 = vpop.f32.mrf.mxu0
        %637 = vdwg.mxu0
        %vm638 = vcmask 64512
        %v639 = vsel %vm638, %v633, -inf
        %640 = vmax.xlane.f32.xlu0 %v639
        %v641 = vpop.xlane.xlu0 %640
        %v642 = vsub.f32 %v633, %v641
        %v643 = vmul.f32 %v642, 1.442695
        %v644 = vpow.pop %v643
        %v645 = vsel %vm638, %v644, 0.0
        %646 = vadd.xlane.f32.xlu0 %v645
        %v647 = vpop.xlane.xlu0 %646
        %v648 = vrcp.pop %v647
        %v649 = vmul.f32 %v644, %v648
        %v650 = vpack.c.bf16 %v649, %v649
        %v652 = vsel %vm638, %v650, 0
        %vm654 = vcmask 1043456
        %v656 = vsel %vm654, %v597, 0
        %658 = vmatprep.subr.bf16.mxu0 0
        %659 = vmatpush1.bf16.msra.mxu0 0
        %660 = vmatprep.subr.bf16.mxu0 0
        %661 = vmatpush1.bf16.msra.mxu0 0
        %662 = vmatprep.subr.bf16.mxu0 0
        %663 = vmatpush1.bf16.msra.mxu0 0
        %664 = vmatprep.subr.bf16.mxu0 0
        %665 = vmatpush1.bf16.msra.mxu0 0
        %666 = vmatprep.subr.bf16.mxu0 0
        %667 = vmatpush1.bf16.msra.mxu0 0
        %668 = vmatprep.subr.bf16.mxu0 0
        %669 = vmatpush1.bf16.msra.mxu0 0
        %670 = vmatprep.subr.bf16.mxu0 0
        %671 = vmatpush1.bf16.msra.mxu0 0
        %672 = vmatprep.subr.bf16.mxu0 0
        %673 = vmatpush1.bf16.msra.mxu0 %v656
        %674 = vmatprep.subr.bf16.mxu0 0
        %675 = vmatpush2.bf16.msra.mxu0 0
        %676 = vmatprep.subr.bf16.mxu0 0
        %677 = vmatpush2.bf16.msra.mxu0 0
        %678 = vmatprep.subr.bf16.mxu0 0
        %679 = vmatpush2.bf16.msra.mxu0 0
        %680 = vmatprep.subr.bf16.mxu0 0
        %681 = vmatpush2.bf16.msra.mxu0 0
        %682 = vmatprep.subr.bf16.mxu0 0
        %683 = vmatpush2.bf16.msra.mxu0 0
        %684 = vmatprep.subr.bf16.mxu0 0
        %685 = vmatpush2.bf16.msra.mxu0 0
        %686 = vmatprep.subr.bf16.mxu0 0
        %687 = vmatpush2.bf16.msra.mxu0 0
        %688 = vmatprep.subr.bf16.mxu0 0
        %689 = vmatpush2.bf16.msra.mxu0 0
        %690 = vmatprep.mubr.bf16.mxu0 0
        %691 = vmatmul.mubr.bf16.gmra.mxu0 %v652
        %v692 = vpop.f32.mrf.mxu0
        %v693 = vadd.f32 0.0, %v692
        %v694 = vpop.f32.mrf.mxu0
        %v695 = vpop.f32.mrf.mxu0
        %v696 = vpop.f32.mrf.mxu0
        %697 = vdwg.mxu0
        %v698 = vpack.c.bf16 %v693, %v693
        %v699 = vld [vmem:[%s9] sm:$0xf]
        %v700 = vld [vmem:[%s9 + $0x4] sm:$0xf]
        %v701 = vld [vmem:[%s9 + $0x8] sm:$0xf]
        %v702 = vld [vmem:[%s9 + $0xc] sm:$0xf]
        %v703 = vld [vmem:[%s9 + $0x10] sm:$0xf]
        %v704 = vld [vmem:[%s9 + $0x14] sm:$0xf]
        %v705 = vld [vmem:[%s9 + $0x18] sm:$0xf]
        %v706 = vld [vmem:[%s9 + $0x1c] sm:$0xf]
        %v707 = vld [vmem:[%s9 + $0x20] sm:$0xf]
        %v708 = vld [vmem:[%s9 + $0x24] sm:$0xf]
        %v709 = vld [vmem:[%s9 + $0x28] sm:$0xf]
        %v710 = vld [vmem:[%s9 + $0x2c] sm:$0xf]
        %v711 = vld [vmem:[%s9 + $0x30] sm:$0xf]
        %v712 = vld [vmem:[%s9 + $0x34] sm:$0xf]
        %v713 = vld [vmem:[%s9 + $0x38] sm:$0xf]
        %v714 = vld [vmem:[%s9 + $0x3c] sm:$0xf]
        %v715 = vld [vmem:[%s10] sm:$0x1]
        %v717 = vlaneseq
        %v718 = vshrl.u32 %v717, 7
        %v719 = vsub.s32 0, %v718
        %v720 = vrot.slane %v715, %v719
        %v738 = vunpack.c.l.b16 %v699
        %v739 = vunpack.c.l.b16 %v700
        %v740 = vunpack.c.l.b16 %v701
        %v741 = vunpack.c.l.b16 %v702
        %v742 = vunpack.c.l.b16 %v703
        %v743 = vunpack.c.l.b16 %v704
        %v744 = vunpack.c.l.b16 %v705
        %v745 = vunpack.c.l.b16 %v706
        %v746 = vunpack.c.l.b16 %v707
        %v747 = vunpack.c.l.b16 %v708
        %v748 = vunpack.c.l.b16 %v709
        %v749 = vunpack.c.l.b16 %v710
        %v750 = vunpack.c.l.b16 %v711
        %v751 = vunpack.c.l.b16 %v712
        %v752 = vunpack.c.l.b16 %v713
        %v753 = vunpack.c.l.b16 %v714
        %v754 = vpack.c.b16 %v739, %v738
        %v755 = vpack.c.b16 %v741, %v740
        %v756 = vpack.c.b16 %v743, %v742
        %v757 = vpack.c.b16 %v745, %v744
        %v758 = vpack.c.b16 %v747, %v746
        %v759 = vpack.c.b16 %v749, %v748
        %v760 = vpack.c.b16 %v751, %v750
        %v761 = vpack.c.b16 %v753, %v752
        %770 = vmatprep.subr.bf16.mxu0 0
        %771 = vmatpush1.bf16.msra.mxu0 %v761
        %772 = vmatprep.subr.bf16.mxu0 0
        %773 = vmatpush1.bf16.msra.mxu0 %v760
        %774 = vmatprep.subr.bf16.mxu0 0
        %775 = vmatpush1.bf16.msra.mxu0 %v759
        %776 = vmatprep.subr.bf16.mxu0 0
        %777 = vmatpush1.bf16.msra.mxu0 %v758
        %778 = vmatprep.subr.bf16.mxu0 0
        %779 = vmatpush1.bf16.msra.mxu0 %v757
        %780 = vmatprep.subr.bf16.mxu0 0
        %781 = vmatpush1.bf16.msra.mxu0 %v756
        %782 = vmatprep.subr.bf16.mxu0 0
        %783 = vmatpush1.bf16.msra.mxu0 %v755
        %784 = vmatprep.subr.bf16.mxu0 0
        %785 = vmatpush1.bf16.msra.mxu0 %v754
        %786 = vmatprep.subr.bf16.mxu0 0
        %787 = vmatpush2.bf16.msra.mxu0 0
        %788 = vmatprep.subr.bf16.mxu0 0
        %789 = vmatpush2.bf16.msra.mxu0 0
        %790 = vmatprep.subr.bf16.mxu0 0
        %791 = vmatpush2.bf16.msra.mxu0 0
        %792 = vmatprep.subr.bf16.mxu0 0
        %793 = vmatpush2.bf16.msra.mxu0 0
        %794 = vmatprep.subr.bf16.mxu0 0
        %795 = vmatpush2.bf16.msra.mxu0 0
        %796 = vmatprep.subr.bf16.mxu0 0
        %797 = vmatpush2.bf16.msra.mxu0 0
        %798 = vmatprep.subr.bf16.mxu0 0
        %799 = vmatpush2.bf16.msra.mxu0 0
        %800 = vmatprep.subr.bf16.mxu0 0
        %801 = vmatpush2.bf16.msra.mxu0 0
        %802 = vmatprep.mubr.bf16.mxu0 0
        %803 = vmatmul.mubr.bf16.gmra.mxu0 %v698
        %v804 = vpop.f32.mrf.mxu0
        %v805 = vadd.f32 %v720, %v804
        %v806 = vpop.f32.mrf.mxu0
        %v807 = vpop.f32.mrf.mxu0
        %v808 = vpop.f32.mrf.mxu0
        %809 = vdwg.mxu0
        %810 = vst.msk [vmem:[%s403] sm:$0xff] %vm435, %v805
        %s811 = sand.u32 %s279, 1
        %s812 = scalar_lea.sflag [#allocation3], %s811
        %s813 = sand.u32 %s279, 1
        %s814 = smul.addr %s813, 8
        %s815 = scalar_lea.vmem [#allocation2], %s814
        // Predicated region
        $region65: #{tpu_custom_call.1} parent=63 // pred_check
          %p816 = pneg %p289
        $region66: #{tpu_custom_call.1} parent=63 // pred_check_branch
          %818 = sbr.rel (%p816) target = $region68
        $region67: #{tpu_custom_call.1} parent=63 // pred_region
          %s820 = ssub.s32 128, 128
          %821 = vsyncadd %s812, %s820
          %s822 = smul.addr %s25, 128
          %s823 = scalar_lea.hbm %s11, %s822
          %s825 = sshll.u32 %s815, 4
          %s826 = int_to_ptr.vmem [resolvable:$true] %s825
          %828 = dma.vmem_to_hbm [thread:$0]  %s826, 128, %s823, %s812
        $region68: #{tpu_custom_call.1} parent=63 // pred_fallthru
          _
      $region64: #{tpu_custom_call.1} parent=5 // pred_fallthru
        _
      %p829 = scmp.le.s32.totalorder 2, %s20
      // Predicated region
      $region69: #{tpu_custom_call.1} parent=5 // pred_check
        %p830 = pneg %p829
      $region70: #{tpu_custom_call.1} parent=5 // pred_check_branch
        %832 = sbr.rel (%p830) target = $region72
      $region71: #{tpu_custom_call.1} parent=5 // pred_region
        %s833 = ssub.s32 %s20, 2
        // Predicated region
        $region73: #{tpu_custom_call.1} parent=71 // pred_check
          %p834 = pneg %p295
        $region74: #{tpu_custom_call.1} parent=71 // pred_check_branch
          %836 = sbr.rel (%p834) target = $region76
        $region75: #{tpu_custom_call.1} parent=71 // pred_region
          %s837 = sand.u32 %s280, 1
          %s838 = scalar_lea.sflag [#allocation3], %s837
          %s839 = sand.u32 %s280, 1
          %s840 = smul.addr %s839, 8
          %s841 = scalar_lea.vmem [#allocation2], %s840
          %842 = dma.done %s838, 128
        $region76: #{tpu_custom_call.1} parent=71 // pred_fallthru
          _
      $region72: #{tpu_custom_call.1} parent=5 // pred_fallthru
        _
    $region6: #{tpu_custom_call.1} parent=1 // loop_footer
      %s24 = sadd.s32 1, %s20
    $region7: #{tpu_custom_call.1} parent=1 // loop_footer_branch
      %19 = sbr.rel target = $region3
    $region8: #{tpu_custom_call.1} parent=1 // loop_exit
      _
    %843 = vsyncpa [#allocation3], 1
    %s844 = scalar_lea.sflag [#allocation3], 1
    %845 = vsyncpa %s844, 1

// kernel: tpu_custom_call.1
$region0: #{tpu_custom_call.1}
  #allocation0 [shape = 'u32[]', space=smem, size = 0x4, offset = 0x4, fixed_abs, tag = 'smem constant byte address 0x4 - core index']
  #allocation1 [shape = 'u32[144,128]{1,0:T(1,128)}', space=vmem, size = 0x12000, scoped, tag = 'internal scratch']
  %s0 = inlined_call_operand.vmem [shape: bf16[2,8,16], index: 0, kind: input, shape index: {}]
  %s1 = inlined_call_operand.vmem [shape: bf16[2,8,16], index: 1, kind: input, shape index: {}]
  %s2 = inlined_call_operand.vmem [shape: bf16[2,8,16], index: 2, kind: input, shape index: {}]
  %s3 = inlined_call_operand.vmem [shape: bf16[16,128], index: 3, kind: input, shape index: {}]
  %s4 = inlined_call_operand.vmem [shape: f32[1,128], index: 4, kind: input, shape index: {}]
  %s5 = inlined_call_operand.vmem [shape: bf16[16,128], index: 5, kind: input, shape index: {}]
  %s6 = inlined_call_operand.vmem [shape: f32[1,128], index: 6, kind: input, shape index: {}]
  %s7 = inlined_call_operand.vmem [shape: bf16[16,128], index: 7, kind: input, shape index: {}]
  %s8 = inlined_call_operand.vmem [shape: f32[1,128], index: 8, kind: input, shape index: {}]
  %s9 = inlined_call_operand.vmem [shape: bf16[128,16], index: 9, kind: input, shape index: {}]
  %s10 = inlined_call_operand.vmem [shape: f32[1,16], index: 10, kind: input, shape index: {}]
  %s11 = inlined_call_operand.hbm [shape: f32[2,8,16], index: 11, kind: output, shape index: {}]
  %s12 = sld [smem:[#allocation0]]
  $region77: #{tpu_custom_call.1} parent=0
    _
  %s14 = ssub.s32 1, %s12
  %s15 = scalar_select 0, %s14, %s12
  $region1: #{tpu_custom_call.1} parent=0
    #allocation2 [shape = 'u8[8192]{0}', space=vmem, size = 0x2000, scoped, tag = 'output window, operand 0']
    #allocation3 [shape = 's32[2]{0}', space=sflag, size = 0x8, scoped, tag = 'scoped memory for tpu_custom_call.1']
    %16 = vsyncpa [#allocation3], 0
    %s17 = scalar_lea.sflag [#allocation3], 1
    %18 = vsyncpa %s17, 0
    loop: start=0, step=1, limit=4
    $region2: #{tpu_custom_call.1} parent=1 // loop_pre_header
      _
    $region3: #{tpu_custom_call.1} parent=1 // loop_header
      %s20 = sphi 0, %s24
      %p21 = scmp.ge.s32.totalorder %s20, 4
      %s30 = sphi 0, %s32
      %s33 = sphi 0, %s30
      %s34 = sphi 0, %s33
      %s50 = sphi 0, %s34
      %s56 = sphi 0, %s58
      %s59 = sphi 0, %s56
      %s60 = sphi 0, %s59
      %s76 = sphi 0, %s60
      %s82 = sphi 0, %s84
      %s85 = sphi 0, %s82
      %s86 = sphi 0, %s85
      %s102 = sphi 0, %s86
      %s106 = sphi 0, %s106
      %s108 = sphi 0, %s106
      %s109 = sphi 0, %s108
      %s123 = sphi 0, %s109
      %s127 = sphi 0, %s127
      %s129 = sphi 0, %s127
      %s130 = sphi 0, %s129
      %s144 = sphi 0, %s130
      %s148 = sphi 0, %s148
      %s150 = sphi 0, %s148
      %s151 = sphi 0, %s150
      %s165 = sphi 0, %s151
      %s169 = sphi 0, %s169
      %s171 = sphi 0, %s169
      %s172 = sphi 0, %s171
      %s186 = sphi 0, %s172
      %s190 = sphi 0, %s190
      %s192 = sphi 0, %s190
      %s193 = sphi 0, %s192
      %s207 = sphi 0, %s193
      %s211 = sphi 0, %s211
      %s213 = sphi 0, %s211
      %s214 = sphi 0, %s213
      %s228 = sphi 0, %s214
      %s232 = sphi 0, %s232
      %s234 = sphi 0, %s232
      %s235 = sphi 0, %s234
      %s249 = sphi 0, %s235
      %s253 = sphi 0, %s253
      %s255 = sphi 0, %s253
      %s256 = sphi 0, %s255
      %s270 = sphi 0, %s256
      %s276 = sphi 0, %s278
      %s279 = sphi 0, %s276
      %s280 = sphi 0, %s279
      %s296 = sphi 0, %s280
    $region4: #{tpu_custom_call.1} parent=1 // loop_header_branch
      %23 = sbr.rel (%p21) target = $region8
    $region5: #{tpu_custom_call.1} parent=1 // loop_body
      %s25 = ssub.s32 %s20, 1
      %s26 = ssub.s32 %s20, 2
      %s27 = sadd.s32 %s20, 1
      %s28 = ssub.s32 %s20, %s27
      %p29 = scmp.eq.s32.totalorder %s28, 0
      %s31 = sadd.s32 %s30, 1
      %s32 = scalar_select %p29, %s30, %s31
      %p35 = pneg %p29
      %p36 = scmp.eq.s32.totalorder %s20, 1
      %p37 = por %p35, %p36
      %p38 = scmp.ne.s32.totalorder %s30, %s33
      %p39 = scmp.eq.s32.totalorder %s20, 0
      %p40 = por %p38, %p39
      %p41 = scmp.ne.s32.totalorder %s30, %s33
      %p42 = scmp.eq.s32.totalorder %s25, 1
      %p43 = por %p41, %p42
      %p44 = scmp.ne.s32.totalorder %s33, %s34
      %p45 = scmp.eq.s32.totalorder %s25, 0
      %p46 = por %p44, %p45
      %p47 = scmp.ne.s32.totalorder %s33, %s34
      %p48 = scmp.eq.s32.totalorder %s26, 1
      %p49 = por %p47, %p48
      %p51 = scmp.ne.s32.totalorder %s34, %s50
      %p52 = scmp.eq.s32.totalorder %s26, 0
      %p53 = por %p51, %p52
      %s54 = ssub.s32 %s20, %s27
      %p55 = scmp.eq.s32.totalorder %s54, 0
      %s57 = sadd.s32 %s56, 1
      %s58 = scalar_select %p55, %s56, %s57
      %p61 = pneg %p55
      %p62 = scmp.eq.s32.totalorder %s20, 1
      %p63 = por %p61, %p62
      %p64 = scmp.ne.s32.totalorder %s56, %s59
      %p65 = scmp.eq.s32.totalorder %s20, 0
      %p66 = por %p64, %p65
      %p67 = scmp.ne.s32.totalorder %s56, %s59
      %p68 = scmp.eq.s32.totalorder %s25, 1
      %p69 = por %p67, %p68
      %p70 = scmp.ne.s32.totalorder %s59, %s60
      %p71 = scmp.eq.s32.totalorder %s25, 0
      %p72 = por %p70, %p71
      %p73 = scmp.ne.s32.totalorder %s59, %s60
      %p74 = scmp.eq.s32.totalorder %s26, 1
      %p75 = por %p73, %p74
      %p77 = scmp.ne.s32.totalorder %s60, %s76
      %p78 = scmp.eq.s32.totalorder %s26, 0
      %p79 = por %p77, %p78
      %s80 = ssub.s32 %s20, %s27
      %p81 = scmp.eq.s32.totalorder %s80, 0
      %s83 = sadd.s32 %s82, 1
      %s84 = scalar_select %p81, %s82, %s83
      %p87 = pneg %p81
      %p88 = scmp.eq.s32.totalorder %s20, 1
      %p89 = por %p87, %p88
      %p90 = scmp.ne.s32.totalorder %s82, %s85
      %p91 = scmp.eq.s32.totalorder %s20, 0
      %p92 = por %p90, %p91
      %p93 = scmp.ne.s32.totalorder %s82, %s85
      %p94 = scmp.eq.s32.totalorder %s25, 1
      %p95 = por %p93, %p94
      %p96 = scmp.ne.s32.totalorder %s85, %s86
      %p97 = scmp.eq.s32.totalorder %s25, 0
      %p98 = por %p96, %p97
      %p99 = scmp.ne.s32.totalorder %s85, %s86
      %p100 = scmp.eq.s32.totalorder %s26, 1
      %p101 = por %p99, %p100
      %p103 = scmp.ne.s32.totalorder %s86, %s102
      %p104 = scmp.eq.s32.totalorder %s26, 0
      %p105 = por %p103, %p104
      %s107 = sadd.s32 %s106, 1
      %p110 = scmp.eq.s32.totalorder %s20, 1
      %p111 = scmp.ne.s32.totalorder %s106, %s108
      %p112 = scmp.eq.s32.totalorder %s20, 0
      %p113 = por %p111, %p112
      %p114 = scmp.ne.s32.totalorder %s106, %s108
      %p115 = scmp.eq.s32.totalorder %s25, 1
      %p116 = por %p114, %p115
      %p117 = scmp.ne.s32.totalorder %s108, %s109
      %p118 = scmp.eq.s32.totalorder %s25, 0
      %p119 = por %p117, %p118
      %p120 = scmp.ne.s32.totalorder %s108, %s109
      %p121 = scmp.eq.s32.totalorder %s26, 1
      %p122 = por %p120, %p121
      %p124 = scmp.ne.s32.totalorder %s109, %s123
      %p125 = scmp.eq.s32.totalorder %s26, 0
      %p126 = por %p124, %p125
      %s128 = sadd.s32 %s127, 1
      %p131 = scmp.eq.s32.totalorder %s20, 1
      %p132 = scmp.ne.s32.totalorder %s127, %s129
      %p133 = scmp.eq.s32.totalorder %s20, 0
      %p134 = por %p132, %p133
      %p135 = scmp.ne.s32.totalorder %s127, %s129
      %p136 = scmp.eq.s32.totalorder %s25, 1
      %p137 = por %p135, %p136
      %p138 = scmp.ne.s32.totalorder %s129, %s130
      %p139 = scmp.eq.s32.totalorder %s25, 0
      %p140 = por %p138, %p139
      %p141 = scmp.ne.s32.totalorder %s129, %s130
      %p142 = scmp.eq.s32.totalorder %s26, 1
      %p143 = por %p141, %p142
      %p145 = scmp.ne.s32.totalorder %s130, %s144
      %p146 = scmp.eq.s32.totalorder %s26, 0
      %p147 = por %p145, %p146
      %s149 = sadd.s32 %s148, 1
      %p152 = scmp.eq.s32.totalorder %s20, 1
      %p153 = scmp.ne.s32.totalorder %s148, %s150
      %p154 = scmp.eq.s32.totalorder %s20, 0
      %p155 = por %p153, %p154
      %p156 = scmp.ne.s32.totalorder %s148, %s150
      %p157 = scmp.eq.s32.totalorder %s25, 1
      %p158 = por %p156, %p157
      %p159 = scmp.ne.s32.totalorder %s150, %s151
      %p160 = scmp.eq.s32.totalorder %s25, 0
      %p161 = por %p159, %p160
      %p162 = scmp.ne.s32.totalorder %s150, %s151
      %p163 = scmp.eq.s32.totalorder %s26, 1
      %p164 = por %p162, %p163
      %p166 = scmp.ne.s32.totalorder %s151, %s165
      %p167 = scmp.eq.s32.totalorder %s26, 0
      %p168 = por %p166, %p167
      %s170 = sadd.s32 %s169, 1
      %p173 = scmp.eq.s32.totalorder %s20, 1
      %p174 = scmp.ne.s32.totalorder %s169, %s171
      %p175 = scmp.eq.s32.totalorder %s20, 0
      %p176 = por %p174, %p175
      %p177 = scmp.ne.s32.totalorder %s169, %s171
      %p178 = scmp.eq.s32.totalorder %s25, 1
      %p179 = por %p177, %p178
      %p180 = scmp.ne.s32.totalorder %s171, %s172
      %p181 = scmp.eq.s32.totalorder %s25, 0
      %p182 = por %p180, %p181
      %p183 = scmp.ne.s32.totalorder %s171, %s172
      %p184 = scmp.eq.s32.totalorder %s26, 1
      %p185 = por %p183, %p184
      %p187 = scmp.ne.s32.totalorder %s172, %s186
      %p188 = scmp.eq.s32.totalorder %s26, 0
      %p189 = por %p187, %p188
      %s191 = sadd.s32 %s190, 1
      %p194 = scmp.eq.s32.totalorder %s20, 1
      %p195 = scmp.ne.s32.totalorder %s190, %s192
      %p196 = scmp.eq.s32.totalorder %s20, 0
      %p197 = por %p195, %p196
      %p198 = scmp.ne.s32.totalorder %s190, %s192
      %p199 = scmp.eq.s32.totalorder %s25, 1
      %p200 = por %p198, %p199
      %p201 = scmp.ne.s32.totalorder %s192, %s193
      %p202 = scmp.eq.s32.totalorder %s25, 0
      %p203 = por %p201, %p202
      %p204 = scmp.ne.s32.totalorder %s192, %s193
      %p205 = scmp.eq.s32.totalorder %s26, 1
      %p206 = por %p204, %p205
      %p208 = scmp.ne.s32.totalorder %s193, %s207
      %p209 = scmp.eq.s32.totalorder %s26, 0
      %p210 = por %p208, %p209
      %s212 = sadd.s32 %s211, 1
      %p215 = scmp.eq.s32.totalorder %s20, 1
      %p216 = scmp.ne.s32.totalorder %s211, %s213
      %p217 = scmp.eq.s32.totalorder %s20, 0
      %p218 = por %p216, %p217
      %p219 = scmp.ne.s32.totalorder %s211, %s213
      %p220 = scmp.eq.s32.totalorder %s25, 1
      %p221 = por %p219, %p220
      %p222 = scmp.ne.s32.totalorder %s213, %s214
      %p223 = scmp.eq.s32.totalorder %s25, 0
      %p224 = por %p222, %p223
      %p225 = scmp.ne.s32.totalorder %s213, %s214
      %p226 = scmp.eq.s32.totalorder %s26, 1
      %p227 = por %p225, %p226
      %p229 = scmp.ne.s32.totalorder %s214, %s228
      %p230 = scmp.eq.s32.totalorder %s26, 0
      %p231 = por %p229, %p230
      %s233 = sadd.s32 %s232, 1
      %p236 = scmp.eq.s32.totalorder %s20, 1
      %p237 = scmp.ne.s32.totalorder %s232, %s234
      %p238 = scmp.eq.s32.totalorder %s20, 0
      %p239 = por %p237, %p238
      %p240 = scmp.ne.s32.totalorder %s232, %s234
      %p241 = scmp.eq.s32.totalorder %s25, 1
      %p242 = por %p240, %p241
      %p243 = scmp.ne.s32.totalorder %s234, %s235
      %p244 = scmp.eq.s32.totalorder %s25, 0
      %p245 = por %p243, %p244
      %p246 = scmp.ne.s32.totalorder %s234, %s235
      %p247 = scmp.eq.s32.totalorder %s26, 1
      %p248 = por %p246, %p247
      %p250 = scmp.ne.s32.totalorder %s235, %s249
      %p251 = scmp.eq.s32.totalorder %s26, 0
      %p252 = por %p250, %p251
      %s254 = sadd.s32 %s253, 1
      %p257 = scmp.eq.s32.totalorder %s20, 1
      %p258 = scmp.ne.s32.totalorder %s253, %s255
      %p259 = scmp.eq.s32.totalorder %s20, 0
      %p260 = por %p258, %p259
      %p261 = scmp.ne.s32.totalorder %s253, %s255
      %p262 = scmp.eq.s32.totalorder %s25, 1
      %p263 = por %p261, %p262
      %p264 = scmp.ne.s32.totalorder %s255, %s256
      %p265 = scmp.eq.s32.totalorder %s25, 0
      %p266 = por %p264, %p265
      %p267 = scmp.ne.s32.totalorder %s255, %s256
      %p268 = scmp.eq.s32.totalorder %s26, 1
      %p269 = por %p267, %p268
      %p271 = scmp.ne.s32.totalorder %s256, %s270
      %p272 = scmp.eq.s32.totalorder %s26, 0
      %p273 = por %p271, %p272
      %s274 = ssub.s32 %s20, %s27
      %p275 = scmp.eq.s32.totalorder %s274, 0
      %s277 = sadd.s32 %s276, 1
      %s278 = scalar_select %p275, %s276, %s277
      %p281 = pneg %p275
      %p282 = scmp.eq.s32.totalorder %s20, 1
      %p283 = por %p281, %p282
      %p284 = scmp.ne.s32.totalorder %s276, %s279
      %p285 = scmp.eq.s32.totalorder %s20, 0
      %p286 = por %p284, %p285
      %p287 = scmp.ne.s32.totalorder %s276, %s279
      %p288 = scmp.eq.s32.totalorder %s25, 1
      %p289 = por %p287, %p288
      %p290 = scmp.ne.s32.totalorder %s279, %s280
      %p291 = scmp.eq.s32.totalorder %s25, 0
      %p292 = por %p290, %p291
      %p293 = scmp.ne.s32.totalorder %s279, %s280
      %p294 = scmp.eq.s32.totalorder %s26, 1
      %p295 = por %p293, %p294
      %p297 = scmp.ne.s32.totalorder %s280, %s296
      %p298 = scmp.eq.s32.totalorder %s26, 0
      %p299 = por %p297, %p298
      %p300 = scmp.le.s32.totalorder 1, %s20
      %p301 = scmp.lt.s32.totalorder %s20, 3
      %p302 = pnand %p300, %p301
      %p303 = pneg %p302
      // Predicated region
      $region9: #{tpu_custom_call.1} parent=5 // pred_check
        _
      $region10: #{tpu_custom_call.1} parent=5 // pred_check_branch
        %305 = sbr.rel (%p302) target = $region12
      $region11: #{tpu_custom_call.1} parent=5 // pred_region
        %s306 = ssub.s32 %s20, 1
        // Predicated region
        $region13: #{tpu_custom_call.1} parent=11 // pred_check
          %p307 = pneg %p119
        $region14: #{tpu_custom_call.1} parent=11 // pred_check_branch
          %309 = sbr.rel (%p307) target = $region16
        $region15: #{tpu_custom_call.1} parent=11 // pred_region
          _
        $region16: #{tpu_custom_call.1} parent=11 // pred_fallthru
          _
        // Predicated region
        $region17: #{tpu_custom_call.1} parent=11 // pred_check
          %p310 = pneg %p140
        $region18: #{tpu_custom_call.1} parent=11 // pred_check_branch
          %312 = sbr.rel (%p310) target = $region20
        $region19: #{tpu_custom_call.1} parent=11 // pred_region
          _
        $region20: #{tpu_custom_call.1} parent=11 // pred_fallthru
          _
        // Predicated region
        $region21: #{tpu_custom_call.1} parent=11 // pred_check
          %p313 = pneg %p161
        $region22: #{tpu_custom_call.1} parent=11 // pred_check_branch
          %315 = sbr.rel (%p313) target = $region24
        $region23: #{tpu_custom_call.1} parent=11 // pred_region
          _
        $region24: #{tpu_custom_call.1} parent=11 // pred_fallthru
          _
        // Predicated region
        $region25: #{tpu_custom_call.1} parent=11 // pred_check
          %p316 = pneg %p182
        $region26: #{tpu_custom_call.1} parent=11 // pred_check_branch
          %318 = sbr.rel (%p316) target = $region28
        $region27: #{tpu_custom_call.1} parent=11 // pred_region
          _
        $region28: #{tpu_custom_call.1} parent=11 // pred_fallthru
          _
        // Predicated region
        $region29: #{tpu_custom_call.1} parent=11 // pred_check
          %p319 = pneg %p203
        $region30: #{tpu_custom_call.1} parent=11 // pred_check_branch
          %321 = sbr.rel (%p319) target = $region32
        $region31: #{tpu_custom_call.1} parent=11 // pred_region
          _
        $region32: #{tpu_custom_call.1} parent=11 // pred_fallthru
          _
        // Predicated region
        $region33: #{tpu_custom_call.1} parent=11 // pred_check
          %p322 = pneg %p224
        $region34: #{tpu_custom_call.1} parent=11 // pred_check_branch
          %324 = sbr.rel (%p322) target = $region36
        $region35: #{tpu_custom_call.1} parent=11 // pred_region
          _
        $region36: #{tpu_custom_call.1} parent=11 // pred_fallthru
          _
        // Predicated region
        $region37: #{tpu_custom_call.1} parent=11 // pred_check
          %p325 = pneg %p245
        $region38: #{tpu_custom_call.1} parent=11 // pred_check_branch
          %327 = sbr.rel (%p325) target = $region40
        $region39: #{tpu_custom_call.1} parent=11 // pred_region
          _
        $region40: #{tpu_custom_call.1} parent=11 // pred_fallthru
          _
        // Predicated region
        $region41: #{tpu_custom_call.1} parent=11 // pred_check
          %p328 = pneg %p266
        $region42: #{tpu_custom_call.1} parent=11 // pred_check_branch
          %330 = sbr.rel (%p328) target = $region44
        $region43: #{tpu_custom_call.1} parent=11 // pred_region
          _
        $region44: #{tpu_custom_call.1} parent=11 // pred_fallthru
          _
      $region12: #{tpu_custom_call.1} parent=5 // pred_fallthru
        _
      %p331 = scmp.lt.s32.totalorder %s20, 2
      // Predicated region
      $region45: #{tpu_custom_call.1} parent=5 // pred_check
        %p332 = pneg %p331
      $region46: #{tpu_custom_call.1} parent=5 // pred_check_branch
        %334 = sbr.rel (%p332) target = $region48
      $region47: #{tpu_custom_call.1} parent=5 // pred_region
        // Predicated region
        $region49: #{tpu_custom_call.1} parent=47 // pred_check
          %p335 = pneg %p40
        $region50: #{tpu_custom_call.1} parent=47 // pred_check_branch
          %337 = sbr.rel (%p335) target = $region52
        $region51: #{tpu_custom_call.1} parent=47 // pred_region
          %p338 = scmp.lt.s32.totalorder %s20, 1
          %s339 = scalar_select %p338, %s20, 1
          %s340 = smul.addr %s339, 4
          %s341 = scalar_lea.vmem %s0, %s340
        $region52: #{tpu_custom_call.1} parent=47 // pred_fallthru
          _
        // Predicated region
        $region53: #{tpu_custom_call.1} parent=47 // pred_check
          %p342 = pneg %p66
        $region54: #{tpu_custom_call.1} parent=47 // pred_check_branch
          %344 = sbr.rel (%p342) target = $region56
        $region55: #{tpu_custom_call.1} parent=47 // pred_region
          %p345 = scmp.lt.s32.totalorder %s20, 1
          %s346 = scalar_select %p345, %s20, 1
          %s347 = smul.addr %s346, 4
          %s348 = scalar_lea.vmem %s1, %s347
        $region56: #{tpu_custom_call.1} parent=47 // pred_fallthru
          _
        // Predicated region
        $region57: #{tpu_custom_call.1} parent=47 // pred_check
          %p349 = pneg %p92
        $region58: #{tpu_custom_call.1} parent=47 // pred_check_branch
          %351 = sbr.rel (%p349) target = $region60
        $region59: #{tpu_custom_call.1} parent=47 // pred_region
          %p352 = scmp.lt.s32.totalorder %s20, 1
          %s353 = scalar_select %p352, %s20, 1
          %s354 = smul.addr %s353, 4
          %s355 = scalar_lea.vmem %s2, %s354
        $region60: #{tpu_custom_call.1} parent=47 // pred_fallthru
          _
      $region48: #{tpu_custom_call.1} parent=5 // pred_fallthru
        _
      %p356 = scmp.le.s32.totalorder 1, %s20
      %p357 = scmp.lt.s32.totalorder %s20, 3
      %p358 = pnand %p356, %p357
      %p359 = pneg %p358
      // Predicated region
      $region61: #{tpu_custom_call.1} parent=5 // pred_check
        _
      $region62: #{tpu_custom_call.1} parent=5 // pred_check_branch
        %361 = sbr.rel (%p358) target = $region64
      $region63: #{tpu_custom_call.1} parent=5 // pred_region
        %s362 = ssub.s32 %s20, 1
        %p363 = scmp.lt.s32.totalorder %s25, 1
        %s364 = scalar_select %p363, %s25, 1
        %s365 = smul.addr %s364, 4
        %s366 = scalar_lea.vmem %s0, %s365
        %p367 = pneg %p46
        %p368 = pneg %p43
        %p369 = scmp.lt.s32.totalorder %s25, 1
        %s370 = scalar_select %p369, %s25, 1
        %s371 = smul.addr %s370, 4
        %s372 = scalar_lea.vmem %s1, %s371
        %p373 = pneg %p72
        %p374 = pneg %p69
        %p375 = scmp.lt.s32.totalorder %s25, 1
        %s376 = scalar_select %p375, %s25, 1
        %s377 = smul.addr %s376, 4
        %s378 = scalar_lea.vmem %s2, %s377
        %p379 = pneg %p98
        %p380 = pneg %p95
        %p381 = pneg %p119
        %p382 = pneg %p116
        %p383 = pneg %p140
        %p384 = pneg %p137
        %p385 = pneg %p161
        %p386 = pneg %p158
        %p387 = pneg %p182
        %p388 = pneg %p179
        %p389 = pneg %p203
        %p390 = pneg %p200
        %p391 = pneg %p224
        %p392 = pneg %p221
        %p393 = pneg %p245
        %p394 = pneg %p242
        %p395 = pneg %p266
        %p396 = pneg %p263
        %p397 = pneg %p292
        %p398 = pneg %p289
        %s399 = sand.u32 %s279, 1
        %s400 = scalar_lea.sflag [#allocation3], %s399
        %s401 = sand.u32 %s279, 1
        %s402 = smul.addr %s401, 8
        %s403 = scalar_lea.vmem [#allocation2], %s402
        %p404 = scmp.lt.s32.totalorder %s25, 1
        %s405 = scalar_select %p404, %s25, 1
        %s406 = smul.addr %s405, 4
        %s407 = scalar_lea.vmem %s0, %s406
        %p408 = scmp.lt.s32.totalorder %s25, 1
        %s409 = scalar_select %p408, %s25, 1
        %s410 = smul.addr %s409, 4
        %s411 = scalar_lea.vmem %s1, %s410
        %p412 = scmp.lt.s32.totalorder %s25, 1
        %s413 = scalar_select %p412, %s25, 1
        %s414 = smul.addr %s413, 4
        %s415 = scalar_lea.vmem %s2, %s414
        %v417 = vld [vmem:[%s407] sm:$0xf]
        %v418 = vld [vmem:[%s411] sm:$0xf]
        %v419 = vld [vmem:[%s415] sm:$0xf]
        %v420 = vld [vmem:[%s3] sm:$0xf]
        %v421 = vld [vmem:[%s3 + $0x4] sm:$0xf]
        %v422 = vld [vmem:[%s4] sm:$0x1]
        %v424 = vlaneseq
        %v425 = vshrl.u32 %v424, 7
        %v426 = vsub.s32 0, %v425
        %v427 = vrot.slane %v422, %v426
        %v431 = vunpack.c.l.b16 %v420
        %v432 = vunpack.c.l.b16 %v421
        %v433 = vpack.c.b16 %v432, %v431
        %vm435 = vcmask 130048
        %v437 = vsel %vm435, %v417, 0
        %439 = vmatprep.subr.bf16.mxu0 0
        %440 = vmatpush1.bf16.msra.mxu0 0
        %441 = vmatprep.subr.bf16.mxu0 0
        %442 = vmatpush1.bf16.msra.mxu0 0
        %443 = vmatprep.subr.bf16.mxu0 0
        %444 = vmatpush1.bf16.msra.mxu0 0
        %445 = vmatprep.subr.bf16.mxu0 0
        %446 = vmatpush1.bf16.msra.mxu0 0
        %447 = vmatprep.subr.bf16.mxu0 0
        %448 = vmatpush1.bf16.msra.mxu0 0
        %449 = vmatprep.subr.bf16.mxu0 0
        %450 = vmatpush1.bf16.msra.mxu0 0
        %451 = vmatprep.subr.bf16.mxu0 0
        %452 = vmatpush1.bf16.msra.mxu0 0
        %453 = vmatprep.subr.bf16.mxu0 0
        %454 = vmatpush1.bf16.msra.mxu0 %v433
        %455 = vmatprep.subr.bf16.mxu0 0
        %456 = vmatpush2.bf16.msra.mxu0 0
        %457 = vmatprep.subr.bf16.mxu0 0
        %458 = vmatpush2.bf16.msra.mxu0 0
        %459 = vmatprep.subr.bf16.mxu0 0
        %460 = vmatpush2.bf16.msra.mxu0 0
        %461 = vmatprep.subr.bf16.mxu0 0
        %462 = vmatpush2.bf16.msra.mxu0 0
        %463 = vmatprep.subr.bf16.mxu0 0
        %464 = vmatpush2.bf16.msra.mxu0 0
        %465 = vmatprep.subr.bf16.mxu0 0
        %466 = vmatpush2.bf16.msra.mxu0 0
        %467 = vmatprep.subr.bf16.mxu0 0
        %468 = vmatpush2.bf16.msra.mxu0 0
        %469 = vmatprep.subr.bf16.mxu0 0
        %470 = vmatpush2.bf16.msra.mxu0 0
        %471 = vmatprep.mubr.bf16.mxu0 0
        %472 = vmatmul.mubr.bf16.gmra.mxu0 %v437
        %v473 = vpop.f32.mrf.mxu0
        %v474 = vadd.f32 %v427, %v473
        %v475 = vpop.f32.mrf.mxu0
        %v476 = vpop.f32.mrf.mxu0
        %v477 = vpop.f32.mrf.mxu0
        %478 = vdwg.mxu0
        %v479 = vld [vmem:[%s5] sm:$0xf]
        %v480 = vld [vmem:[%s5 + $0x4] sm:$0xf]
        %v481 = vld [vmem:[%s6] sm:$0x1]
        %v483 = vlaneseq
        %v484 = vshrl.u32 %v483, 7
        %v485 = vsub.s32 0, %v484
        %v486 = vrot.slane %v481, %v485
        %v490 = vunpack.c.l.b16 %v479
        %v491 = vunpack.c.l.b16 %v480
        %v492 = vpack.c.b16 %v491, %v490
        %v495 = vsel %vm435, %v418, 0
        %497 = vmatprep.subr.bf16.mxu0 0
        %498 = vmatpush1.bf16.msra.mxu0 0
        %499 = vmatprep.subr.bf16.mxu0 0
        %500 = vmatpush1.bf16.msra.mxu0 0
        %501 = vmatprep.subr.bf16.mxu0 0
        %502 = vmatpush1.bf16.msra.mxu0 0
        %503 = vmatprep.subr.bf16.mxu0 0
        %504 = vmatpush1.bf16.msra.mxu0 0
        %505 = vmatprep.subr.bf16.mxu0 0
        %506 = vmatpush1.bf16.msra.mxu0 0
        %507 = vmatprep.subr.bf16.mxu0 0
        %508 = vmatpush1.bf16.msra.mxu0 0
        %509 = vmatprep.subr.bf16.mxu0 0
        %510 = vmatpush1.bf16.msra.mxu0 0
        %511 = vmatprep.subr.bf16.mxu0 0
        %512 = vmatpush1.bf16.msra.mxu0 %v492
        %513 = vmatprep.subr.bf16.mxu0 0
        %514 = vmatpush2.bf16.msra.mxu0 0
        %515 = vmatprep.subr.bf16.mxu0 0
        %516 = vmatpush2.bf16.msra.mxu0 0
        %517 = vmatprep.subr.bf16.mxu0 0
        %518 = vmatpush2.bf16.msra.mxu0 0
        %519 = vmatprep.subr.bf16.mxu0 0
        %520 = vmatpush2.bf16.msra.mxu0 0
        %521 = vmatprep.subr.bf16.mxu0 0
        %522 = vmatpush2.bf16.msra.mxu0 0
        %523 = vmatprep.subr.bf16.mxu0 0
        %524 = vmatpush2.bf16.msra.mxu0 0
        %525 = vmatprep.subr.bf16.mxu0 0
        %526 = vmatpush2.bf16.msra.mxu0 0
        %527 = vmatprep.subr.bf16.mxu0 0
        %528 = vmatpush2.bf16.msra.mxu0 0
        %529 = vmatprep.mubr.bf16.mxu0 0
        %530 = vmatmul.mubr.bf16.gmra.mxu0 %v495
        %v531 = vpop.f32.mrf.mxu0
        %v532 = vadd.f32 %v486, %v531
        %v533 = vpop.f32.mrf.mxu0
        %v534 = vpop.f32.mrf.mxu0
        %v535 = vpop.f32.mrf.mxu0
        %536 = vdwg.mxu0
        %v537 = vld [vmem:[%s7] sm:$0xf]
        %v538 = vld [vmem:[%s7 + $0x4] sm:$0xf]
        %v539 = vld [vmem:[%s8] sm:$0x1]
        %v541 = vlaneseq
        %v542 = vshrl.u32 %v541, 7
        %v543 = vsub.s32 0, %v542
        %v544 = vrot.slane %v539, %v543
        %v548 = vunpack.c.l.b16 %v537
        %v549 = vunpack.c.l.b16 %v538
        %v550 = vpack.c.b16 %v549, %v548
        %v553 = vsel %vm435, %v419, 0
        %555 = vmatprep.subr.bf16.mxu0 0
        %556 = vmatpush1.bf16.msra.mxu0 0
        %557 = vmatprep.subr.bf16.mxu0 0
        %558 = vmatpush1.bf16.msra.mxu0 0
        %559 = vmatprep.subr.bf16.mxu0 0
        %560 = vmatpush1.bf16.msra.mxu0 0
        %561 = vmatprep.subr.bf16.mxu0 0
        %562 = vmatpush1.bf16.msra.mxu0 0
        %563 = vmatprep.subr.bf16.mxu0 0
        %564 = vmatpush1.bf16.msra.mxu0 0
        %565 = vmatprep.subr.bf16.mxu0 0
        %566 = vmatpush1.bf16.msra.mxu0 0
        %567 = vmatprep.subr.bf16.mxu0 0
        %568 = vmatpush1.bf16.msra.mxu0 0
        %569 = vmatprep.subr.bf16.mxu0 0
        %570 = vmatpush1.bf16.msra.mxu0 %v550
        %571 = vmatprep.subr.bf16.mxu0 0
        %572 = vmatpush2.bf16.msra.mxu0 0
        %573 = vmatprep.subr.bf16.mxu0 0
        %574 = vmatpush2.bf16.msra.mxu0 0
        %575 = vmatprep.subr.bf16.mxu0 0
        %576 = vmatpush2.bf16.msra.mxu0 0
        %577 = vmatprep.subr.bf16.mxu0 0
        %578 = vmatpush2.bf16.msra.mxu0 0
        %579 = vmatprep.subr.bf16.mxu0 0
        %580 = vmatpush2.bf16.msra.mxu0 0
        %581 = vmatprep.subr.bf16.mxu0 0
        %582 = vmatpush2.bf16.msra.mxu0 0
        %583 = vmatprep.subr.bf16.mxu0 0
        %584 = vmatpush2.bf16.msra.mxu0 0
        %585 = vmatprep.subr.bf16.mxu0 0
        %586 = vmatpush2.bf16.msra.mxu0 0
        %587 = vmatprep.mubr.bf16.mxu0 0
        %588 = vmatmul.mubr.bf16.gmra.mxu0 %v553
        %v589 = vpop.f32.mrf.mxu0
        %v590 = vadd.f32 %v544, %v589
        %v591 = vpop.f32.mrf.mxu0
        %v592 = vpop.f32.mrf.mxu0
        %v593 = vpop.f32.mrf.mxu0
        %594 = vdwg.mxu0
        %v595 = vpack.c.bf16 %v474, %v474
        %v596 = vpack.c.bf16 %v532, %v532
        %v597 = vpack.c.bf16 %v590, %v590
        %598 = vmatprep.subr.bf16.mxu0 0
        %599 = vmatpush1.bf16.xpose.msra.mxu0 0
        %600 = vmatprep.subr.bf16.mxu0 0
        %601 = vmatpush1.bf16.xpose.msra.mxu0 0
        %602 = vmatprep.subr.bf16.mxu0 0
        %603 = vmatpush1.bf16.xpose.msra.mxu0 0
        %604 = vmatprep.subr.bf16.mxu0 0
        %605 = vmatpush1.bf16.xpose.msra.mxu0 0
        %606 = vmatprep.subr.bf16.mxu0 0
        %607 = vmatpush1.bf16.xpose.msra.mxu0 0
        %608 = vmatprep.subr.bf16.mxu0 0
        %609 = vmatpush1.bf16.xpose.msra.mxu0 0
        %610 = vmatprep.subr.bf16.mxu0 0
        %611 = vmatpush1.bf16.xpose.msra.mxu0 0
        %612 = vmatprep.subr.bf16.mxu0 0
        %613 = vmatpush1.bf16.xpose.msra.mxu0 %v596
        %614 = vmatprep.subr.bf16.mxu0 0
        %615 = vmatpush2.bf16.xpose.msra.mxu0 0
        %616 = vmatprep.subr.bf16.mxu0 0
        %617 = vmatpush2.bf16.xpose.msra.mxu0 0
        %618 = vmatprep.subr.bf16.mxu0 0
        %619 = vmatpush2.bf16.xpose.msra.mxu0 0
        %620 = vmatprep.subr.bf16.mxu0 0
        %621 = vmatpush2.bf16.xpose.msra.mxu0 0
        %622 = vmatprep.subr.bf16.mxu0 0
        %623 = vmatpush2.bf16.xpose.msra.mxu0 0
        %624 = vmatprep.subr.bf16.mxu0 0
        %625 = vmatpush2.bf16.xpose.msra.mxu0 0
        %626 = vmatprep.subr.bf16.mxu0 0
        %627 = vmatpush2.bf16.xpose.msra.mxu0 0
        %628 = vmatprep.subr.bf16.mxu0 0
        %629 = vmatpush2.bf16.xpose.msra.mxu0 0
        %630 = vmatprep.mubr.bf16.mxu0 0
        %631 = vmatmul.mubr.bf16.gmra.mxu0 %v595
        %v632 = vpop.f32.mrf.mxu0
        %v633 = vadd.f32 0.0, %v632
        %v634 = vpop.f32.mrf.mxu0
        %v635 = vpop.f32.mrf.mxu0
        %v636 = vpop.f32.mrf.mxu0
        %637 = vdwg.mxu0
        %vm638 = vcmask 64512
        %v639 = vsel %vm638, %v633, -inf
        %640 = vmax.xlane.f32.xlu0 %v639
        %v641 = vpop.xlane.xlu0 %640
        %v642 = vsub.f32 %v633, %v641
        %v643 = vmul.f32 %v642, 1.442695
        %v644 = vpow.pop %v643
        %v645 = vsel %vm638, %v644, 0.0
        %646 = vadd.xlane.f32.xlu0 %v645
        %v647 = vpop.xlane.xlu0 %646
        %v648 = vrcp.pop %v647
        %v649 = vmul.f32 %v644, %v648
        %v650 = vpack.c.bf16 %v649, %v649
        %v652 = vsel %vm638, %v650, 0
        %vm654 = vcmask 1043456
        %v656 = vsel %vm654, %v597, 0
        %658 = vmatprep.subr.bf16.mxu0 0
        %659 = vmatpush1.bf16.msra.mxu0 0
        %660 = vmatprep.subr.bf16.mxu0 0
        %661 = vmatpush1.bf16.msra.mxu0 0
        %662 = vmatprep.subr.bf16.mxu0 0
        %663 = vmatpush1.bf16.msra.mxu0 0
        %664 = vmatprep.subr.bf16.mxu0 0
        %665 = vmatpush1.bf16.msra.mxu0 0
        %666 = vmatprep.subr.bf16.mxu0 0
        %667 = vmatpush1.bf16.msra.mxu0 0
        %668 = vmatprep.subr.bf16.mxu0 0
        %669 = vmatpush1.bf16.msra.mxu0 0
        %670 = vmatprep.subr.bf16.mxu0 0
        %671 = vmatpush1.bf16.msra.mxu0 0
        %672 = vmatprep.subr.bf16.mxu0 0
        %673 = vmatpush1.bf16.msra.mxu0 %v656
        %674 = vmatprep.subr.bf16.mxu0 0
        %675 = vmatpush2.bf16.msra.mxu0 0
        %676 = vmatprep.subr.bf16.mxu0 0
        %677 = vmatpush2.bf16.msra.mxu0 0
        %678 = vmatprep.subr.bf16.mxu0 0
        %679 = vmatpush2.bf16.msra.mxu0 0
        %680 = vmatprep.subr.bf16.mxu0 0
        %681 = vmatpush2.bf16.msra.mxu0 0
        %682 = vmatprep.subr.bf16.mxu0 0
        %683 = vmatpush2.bf16.msra.mxu0 0
        %684 = vmatprep.subr.bf16.mxu0 0
        %685 = vmatpush2.bf16.msra.mxu0 0
        %686 = vmatprep.subr.bf16.mxu0 0
        %687 = vmatpush2.bf16.msra.mxu0 0
        %688 = vmatprep.subr.bf16.mxu0 0
        %689 = vmatpush2.bf16.msra.mxu0 0
        %690 = vmatprep.mubr.bf16.mxu0 0
        %691 = vmatmul.mubr.bf16.gmra.mxu0 %v652
        %v692 = vpop.f32.mrf.mxu0
        %v693 = vadd.f32 0.0, %v692
        %v694 = vpop.f32.mrf.mxu0
        %v695 = vpop.f32.mrf.mxu0
        %v696 = vpop.f32.mrf.mxu0
        %697 = vdwg.mxu0
        %v698 = vpack.c.bf16 %v693, %v693
        %v699 = vld [vmem:[%s9] sm:$0xf]
        %v700 = vld [vmem:[%s9 + $0x4] sm:$0xf]
        %v701 = vld [vmem:[%s9 + $0x8] sm:$0xf]
        %v702 = vld [vmem:[%s9 + $0xc] sm:$0xf]
        %v703 = vld [vmem:[%s9 + $0x10] sm:$0xf]
        %v704 = vld [vmem:[%s9 + $0x14] sm:$0xf]
        %v705 = vld [vmem:[%s9 + $0x18] sm:$0xf]
        %v706 = vld [vmem:[%s9 + $0x1c] sm:$0xf]
        %v707 = vld [vmem:[%s9 + $0x20] sm:$0xf]
        %v708 = vld [vmem:[%s9 + $0x24] sm:$0xf]
        %v709 = vld [vmem:[%s9 + $0x28] sm:$0xf]
        %v710 = vld [vmem:[%s9 + $0x2c] sm:$0xf]
        %v711 = vld [vmem:[%s9 + $0x30] sm:$0xf]
        %v712 = vld [vmem:[%s9 + $0x34] sm:$0xf]
        %v713 = vld [vmem:[%s9 + $0x38] sm:$0xf]
        %v714 = vld [vmem:[%s9 + $0x3c] sm:$0xf]
        %v715 = vld [vmem:[%s10] sm:$0x1]
        %v717 = vlaneseq
        %v718 = vshrl.u32 %v717, 7
        %v719 = vsub.s32 0, %v718
        %v720 = vrot.slane %v715, %v719
        %v738 = vunpack.c.l.b16 %v699
        %v739 = vunpack.c.l.b16 %v700
        %v740 = vunpack.c.l.b16 %v701
        %v741 = vunpack.c.l.b16 %v702
        %v742 = vunpack.c.l.b16 %v703
        %v743 = vunpack.c.l.b16 %v704
        %v744 = vunpack.c.l.b16 %v705
        %v745 = vunpack.c.l.b16 %v706
        %v746 = vunpack.c.l.b16 %v707
        %v747 = vunpack.c.l.b16 %v708
        %v748 = vunpack.c.l.b16 %v709
        %v749 = vunpack.c.l.b16 %v710
        %v750 = vunpack.c.l.b16 %v711
        %v751 = vunpack.c.l.b16 %v712
        %v752 = vunpack.c.l.b16 %v713
        %v753 = vunpack.c.l.b16 %v714
        %v754 = vpack.c.b16 %v739, %v738
        %v755 = vpack.c.b16 %v741, %v740
        %v756 = vpack.c.b16 %v743, %v742
        %v757 = vpack.c.b16 %v745, %v744
        %v758 = vpack.c.b16 %v747, %v746
        %v759 = vpack.c.b16 %v749, %v748
        %v760 = vpack.c.b16 %v751, %v750
        %v761 = vpack.c.b16 %v753, %v752
        %770 = vmatprep.subr.bf16.mxu0 0
        %771 = vmatpush1.bf16.msra.mxu0 %v761
        %772 = vmatprep.subr.bf16.mxu0 0
        %773 = vmatpush1.bf16.msra.mxu0 %v760
        %774 = vmatprep.subr.bf16.mxu0 0
        %775 = vmatpush1.bf16.msra.mxu0 %v759
        %776 = vmatprep.subr.bf16.mxu0 0
        %777 = vmatpush1.bf16.msra.mxu0 %v758
        %778 = vmatprep.subr.bf16.mxu0 0
        %779 = vmatpush1.bf16.msra.mxu0 %v757
        %780 = vmatprep.subr.bf16.mxu0 0
        %781 = vmatpush1.bf16.msra.mxu0 %v756
        %782 = vmatprep.subr.bf16.mxu0 0
        %783 = vmatpush1.bf16.msra.mxu0 %v755
        %784 = vmatprep.subr.bf16.mxu0 0
        %785 = vmatpush1.bf16.msra.mxu0 %v754
        %786 = vmatprep.subr.bf16.mxu0 0
        %787 = vmatpush2.bf16.msra.mxu0 0
        %788 = vmatprep.subr.bf16.mxu0 0
        %789 = vmatpush2.bf16.msra.mxu0 0
        %790 = vmatprep.subr.bf16.mxu0 0
        %791 = vmatpush2.bf16.msra.mxu0 0
        %792 = vmatprep.subr.bf16.mxu0 0
        %793 = vmatpush2.bf16.msra.mxu0 0
        %794 = vmatprep.subr.bf16.mxu0 0
        %795 = vmatpush2.bf16.msra.mxu0 0
        %796 = vmatprep.subr.bf16.mxu0 0
        %797 = vmatpush2.bf16.msra.mxu0 0
        %798 = vmatprep.subr.bf16.mxu0 0
        %799 = vmatpush2.bf16.msra.mxu0 0
        %800 = vmatprep.subr.bf16.mxu0 0
        %801 = vmatpush2.bf16.msra.mxu0 0
        %802 = vmatprep.mubr.bf16.mxu0 0
        %803 = vmatmul.mubr.bf16.gmra.mxu0 %v698
        %v804 = vpop.f32.mrf.mxu0
        %v805 = vadd.f32 %v720, %v804
        %v806 = vpop.f32.mrf.mxu0
        %v807 = vpop.f32.mrf.mxu0
        %v808 = vpop.f32.mrf.mxu0
        %809 = vdwg.mxu0
        %810 = vst.msk [vmem:[%s403] sm:$0xff] %vm435, %v805
        %s811 = sand.u32 %s279, 1
        %s812 = scalar_lea.sflag [#allocation3], %s811
        %s813 = sand.u32 %s279, 1
        %s814 = smul.addr %s813, 8
        %s815 = scalar_lea.vmem [#allocation2], %s814
        // Predicated region
        $region65: #{tpu_custom_call.1} parent=63 // pred_check
          %p816 = pneg %p289
        $region66: #{tpu_custom_call.1} parent=63 // pred_check_branch
          %818 = sbr.rel (%p816) target = $region68
        $region67: #{tpu_custom_call.1} parent=63 // pred_region
          %s820 = ssub.s32 128, 128
          %821 = vsyncadd %s812, %s820
          %s822 = smul.addr %s25, 128
          %s823 = scalar_lea.hbm %s11, %s822
          %s825 = sshll.u32 %s815, 4
          %s826 = int_to_ptr.vmem [resolvable:$true] %s825
          %828 = dma.vmem_to_hbm [thread:$0]  %s826, 128, %s823, %s812
        $region68: #{tpu_custom_call.1} parent=63 // pred_fallthru
          _
      $region64: #{tpu_custom_call.1} parent=5 // pred_fallthru
        _
      %p829 = scmp.le.s32.totalorder 2, %s20
      // Predicated region
      $region69: #{tpu_custom_call.1} parent=5 // pred_check
        %p830 = pneg %p829
      $region70: #{tpu_custom_call.1} parent=5 // pred_check_branch
        %832 = sbr.rel (%p830) target = $region72
      $region71: #{tpu_custom_call.1} parent=5 // pred_region
        %s833 = ssub.s32 %s20, 2
        // Predicated region
        $region73: #{tpu_custom_call.1} parent=71 // pred_check
          %p834 = pneg %p295
        $region74: #{tpu_custom_call.1} parent=71 // pred_check_branch
          %836 = sbr.rel (%p834) target = $region76
        $region75: #{tpu_custom_call.1} parent=71 // pred_region
          %s837 = sand.u32 %s280, 1
          %s838 = scalar_lea.sflag [#allocation3], %s837
          %s839 = sand.u32 %s280, 1
          %s840 = smul.addr %s839, 8
          %s841 = scalar_lea.vmem [#allocation2], %s840
          %842 = dma.done %s838, 128
        $region76: #{tpu_custom_call.1} parent=71 // pred_fallthru
          _
      $region72: #{tpu_custom_call.1} parent=5 // pred_fallthru
        _
    $region6: #{tpu_custom_call.1} parent=1 // loop_footer
      %s24 = sadd.s32 1, %s20
    $region7: #{tpu_custom_call.1} parent=1 // loop_footer_branch
      %19 = sbr.rel target = $region3
    $region8: #{tpu_custom_call.1} parent=1 // loop_exit
      _
    %843 = vsyncpa [#allocation3], 1
    %s844 = scalar_lea.sflag [#allocation3], 1
    %845 = vsyncpa %s844, 1

</llo_original>
